<compile_context>
chip_gen: v5e
topology: v5e:2x2
jax: 0.10.0
libtpu: 0.0.40
codegen_flags: <defaults>
</compile_context>

<pallas_src>
import jax
import jax.numpy as jnp
from jax import lax
from jax.experimental import pallas as pl
from jax.experimental.pallas import tpu as pltpu

D_MODEL = 32
NHEAD = 4
DIM_FF = 64
HEAD_DIM = D_MODEL // NHEAD
LN_EPS = 1e-5
SCALE = 1.0 / float(HEAD_DIM) ** 0.5
OUT_W = 128                      # lane width of the packed output block

# Weight slab: (W_SLAB_ROWS, 7*128) f32, every region 128-lane aligned.
W_SLAB_ROWS = 64                 # max(D_MODEL rows, DIM_FF rows for W2^T)
OFF_FUSED  = 0 * 128             # lanes [0,256): [Wqkv_sa^T (D,3D) | pad | Wkv_ca^T (D,2D) | pad]
OFF_CA_KV  = 1 * 128             # start of the cross-attn Wkv^T sub-region (inside the fused block)
OFF_SA_OUT = 2 * 128             # (D, D)  self-attn  Wout^T
OFF_CA_Q   = 3 * 128             # (D, D)  cross-attn Wq^T
OFF_CA_OUT = 4 * 128             # (D, D)  cross-attn Wout^T
OFF_W1     = 5 * 128             # (D, FF) linear1^T
OFF_W2T    = 6 * 128             # (FF, D) linear2^T (pre-transposed at pack time)
W_SLAB_W   = 7 * 128

# Bias / LayerNorm slab: (16, 128) f32, one parameter vector per row.
ROW_SA_IN_B, ROW_SA_OUT_B = 0, 1
ROW_CA_Q_B, ROW_CA_KV_B, ROW_CA_OUT_B = 2, 3, 4
ROW_B1, ROW_B2 = 5, 6
ROW_N1W, ROW_N1B, ROW_N2W, ROW_N2B, ROW_N3W, ROW_N3B = 7, 8, 9, 10, 11, 12
B_SLAB_ROWS = 16


# ---------- in-kernel helpers (traced inside the Pallas body) ----------

def _mm(a, b):
    # a @ b  -> MXU, f32 accumulation
    return lax.dot_general(a, b, (((1,), (0,)), ((), ())),
                           preferred_element_type=jnp.float32)


def _layernorm(x, gamma, beta):
    mu = jnp.mean(x, axis=-1, keepdims=True)
    var = jnp.mean((x - mu) ** 2, axis=-1, keepdims=True)
    return (x - mu) * lax.rsqrt(var + LN_EPS) * gamma + beta


def _heads(t2d, batch, seq, group0):
    # t2d: (batch*seq, n*D) -> (batch*NHEAD, seq, HEAD_DIM) for lane groups
    # [group0, group0+NHEAD).  Leading batch dim ordering is (b, h).
    t3 = t2d.reshape(batch, seq, t2d.shape[-1])
    hs = jnp.stack(
        [t3[:, :, (group0 + h) * HEAD_DIM:(group0 + h + 1) * HEAD_DIM]
         for h in range(NHEAD)], axis=1)                      # (B, H, S, HD)
    return hs.reshape(batch * NHEAD, seq, HEAD_DIM)


def _merge_heads(ctx, batch, seq):
    # (batch*NHEAD, seq, HEAD_DIM) -> (batch*seq, D_MODEL), heads along lanes.
    c4 = ctx.reshape(batch, NHEAD, seq, HEAD_DIM)
    return jnp.concatenate([c4[:, h] for h in range(NHEAD)],
                           axis=-1).reshape(batch * seq, D_MODEL)


def _attention(q, k, v, exact_softmax):
    # q: (BH, Sq, HD); k, v: (BH, Sk, HD) -> ctx (BH, Sq, HD), probs (BH, Sq, Sk)
    s = lax.dot_general(q, k, (((2,), (2,)), ((0,), (0,))),
                        preferred_element_type=jnp.float32) * SCALE
    s = s - jnp.max(s, axis=-1, keepdims=True)
    e = jnp.exp(s)
    den = jnp.sum(e, axis=-1, keepdims=True)
    if exact_softmax:
        p = e / den                                    # exact: probs are returned
    else:
        p = e * pl.reciprocal(den, approx=True)        # EUP slot, internal only
    ctx = lax.dot_general(p, v, (((2,), (1,)), ((0,), (0,))),
                          preferred_element_type=jnp.float32)
    return ctx, p


# ---------- fused decoder-layer kernel (whole batch in one block) ----------

def decoder_layer_kernel(tgt_ref, mem_ref, w_ref, b_ref, out_ref):
    D, FF = D_MODEL, DIM_FF
    B, S_t, _ = tgt_ref.shape
    S_m = mem_ref.shape[1]
    N_t, N_m = B * S_t, B * S_m

    x = tgt_ref[...].reshape(N_t, D)          # (B*S_t, D)
    mem = mem_ref[...].reshape(N_m, D)        # (B*S_m, D)

    # ----- fused projections independent of norm1: one MXU dispatch -----
    # rows [0, N_t)   x columns [0, 3D)              -> self-attn Q,K,V of tgt
    # rows [N_t, end) x columns [128, 128 + 2D)      -> cross-attn K,V of memory
    both = jnp.concatenate([x, mem], axis=0)                        # (N_t+N_m, D)
    proj = _mm(both, w_ref[0:D, OFF_FUSED:OFF_FUSED + 2 * 128])     # (N, 256)
    qkv = proj[0:N_t, 0:3 * D] + b_ref[ROW_SA_IN_B:ROW_SA_IN_B + 1, 0:3 * D]
    kv = proj[N_t:N_t + N_m, OFF_CA_KV:OFF_CA_KV + 2 * D] \
        + b_ref[ROW_CA_KV_B:ROW_CA_KV_B + 1, 0:2 * D]

    # ----- self-attention + residual + norm1 (dropout = identity in eval) -----
    ctx, _ = _attention(_heads(qkv, B, S_t, 0),
                        _heads(qkv, B, S_t, NHEAD),
                        _heads(qkv, B, S_t, 2 * NHEAD),
                        exact_softmax=False)
    sa = _mm(_merge_heads(ctx, B, S_t), w_ref[0:D, OFF_SA_OUT:OFF_SA_OUT + D]) \
        + b_ref[ROW_SA_OUT_B:ROW_SA_OUT_B + 1, 0:D]
    x = _layernorm(x + sa,
                   b_ref[ROW_N1W:ROW_N1W + 1, 0:D],
                   b_ref[ROW_N1B:ROW_N1B + 1, 0:D])

    # ----- cross-attention + residual + norm2 (head-averaged attn weights) -----
    q = _mm(x, w_ref[0:D, OFF_CA_Q:OFF_CA_Q + D]) \
        + b_ref[ROW_CA_Q_B:ROW_CA_Q_B + 1, 0:D]                     # (N_t, D)
    ctx, p = _attention(_heads(q, B, S_t, 0),
                        _heads(kv, B, S_m, 0),
                        _heads(kv, B, S_m, NHEAD),
                        exact_softmax=True)
    ca = _mm(_merge_heads(ctx, B, S_t), w_ref[0:D, OFF_CA_OUT:OFF_CA_OUT + D]) \
        + b_ref[ROW_CA_OUT_B:ROW_CA_OUT_B + 1, 0:D]
    attn = jnp.mean(p.reshape(B, NHEAD, S_t, S_m), axis=1)          # (B, S_t, S_m)
    x = _layernorm(x + ca,
                   b_ref[ROW_N2W:ROW_N2W + 1, 0:D],
                   b_ref[ROW_N2B:ROW_N2B + 1, 0:D])

    # ----- feed-forward (relu) + residual + norm3 -----
    h = jnp.maximum(_mm(x, w_ref[0:D, OFF_W1:OFF_W1 + FF])
                    + b_ref[ROW_B1:ROW_B1 + 1, 0:FF], 0.0)          # (N_t, FF)
    ff = _mm(h, w_ref[0:FF, OFF_W2T:OFF_W2T + D]) \
        + b_ref[ROW_B2:ROW_B2 + 1, 0:D]                             # (N_t, D)
    x = _layernorm(x + ff,
                   b_ref[ROW_N3W:ROW_N3W + 1, 0:D],
                   b_ref[ROW_N3B:ROW_N3B + 1, 0:D])

    # ----- two static lane sub-slice stores into the 128-wide output block.
    # Lanes [D+S_m, 128) are left untouched (stale) and never read back.
    out_ref[:, :, 0:D] = x.reshape(B, S_t, D)
    out_ref[:, :, D:D + S_m] = attn


# ---------- parameter packing (call once, outside the forward path) ----------

def _region(mat):
    mat = jnp.asarray(mat, jnp.float32)
    blk = jnp.zeros((W_SLAB_ROWS, 128), jnp.float32)
    return blk.at[0:mat.shape[0], 0:mat.shape[1]].set(mat)


def _bias_row(v):
    v = jnp.reshape(jnp.asarray(v, jnp.float32), (-1,))
    return jnp.pad(v, (0, 128 - v.shape[0]))[None, :]


def pack_params(params):
    """Pack the 18 parameter arrays into 2 lane-aligned slabs."""
    (sa_w, sa_b, sa_ow, sa_ob, ca_w, ca_b, ca_ow, ca_ob,
     w1, b1, w2, b2, n1w, n1b, n2w, n2b, n3w, n3b) = params
    D = D_MODEL
    w_slab = jnp.concatenate([
        _region(sa_w.T),            # [0,128)    self-attn Wqkv^T        (D, 3D)
        _region(ca_w[D:3 * D].T),   # [128,256)  cross-attn Wkv^T        (D, 2D)
        _region(sa_ow.T),           # [256,384)  self-attn Wout^T        (D, D)
        _region(ca_w[0:D].T),       # [384,512)  cross-attn Wq^T         (D, D)
        _region(ca_ow.T),           # [512,640)  cross-attn Wout^T       (D, D)
        _region(w1.T),              # [640,768)  linear1^T               (D, FF)
        _region(w2.T),              # [768,896)  linear2^T pre-transposed (FF, D)
    ], axis=1)

    rows = [
        _bias_row(sa_b), _bias_row(sa_ob),
        _bias_row(ca_b[:, 0:D]), _bias_row(ca_b[:, D:3 * D]), _bias_row(ca_ob),
        _bias_row(b1), _bias_row(b2),
        _bias_row(n1w), _bias_row(n1b),
        _bias_row(n2w), _bias_row(n2b),
        _bias_row(n3w), _bias_row(n3b),
    ]
    b_slab = jnp.concatenate(
        rows + [jnp.zeros((B_SLAB_ROWS - len(rows), 128), jnp.float32)], axis=0)
    return w_slab, b_slab


# ---------- wrapper ----------

def transformer_decoder_layer(tgt, memory, w_slab, b_slab):
    """tgt: (B, S_t, D), memory: (B, S_m, D); slabs from pack_params (packed once).
    Returns (out (B, S_t, D), cross_attn_weights (B, S_t, S_m))."""
    B, S_t, D = tgt.shape
    _, S_m, _ = memory.shape
    assert D == D_MODEL and D + S_m <= OUT_W

    packed = pl.pallas_call(
        decoder_layer_kernel,
        grid=(1,),                                       # batch folded into the block
        in_specs=[
            pl.BlockSpec((B, S_t, D), lambda i: (0, 0, 0)),
            pl.BlockSpec((B, S_m, D), lambda i: (0, 0, 0)),
            pl.BlockSpec((W_SLAB_ROWS, W_SLAB_W), lambda i: (0, 0)),
            pl.BlockSpec((B_SLAB_ROWS, 128), lambda i: (0, 0)),
        ],
        out_specs=pl.BlockSpec((B, S_t, OUT_W), lambda i: (0, 0, 0)),
        out_shape=jax.ShapeDtypeStruct((B, S_t, OUT_W), jnp.float32),
        compiler_params=pltpu.CompilerParams(
            dimension_semantics=("arbitrary",)),
    )(tgt, memory, w_slab, b_slab)

    out = packed[:, :, 0:D]
    attn = packed[:, :, D:D + S_m]
    return out, attn


# ---------- deterministic parameter construction ----------

def make_params(key):
    ks = jax.random.split(key, 16)
    f32 = jnp.float32

    def w(k, shape, scale=0.05):
        return (scale * jax.random.normal(k, shape)).astype(f32)

    return [
        w(ks[0], (3 * D_MODEL, D_MODEL)),        # sa in_proj_weight
        w(ks[1], (1, 3 * D_MODEL), 0.01),        # sa in_proj_bias
        w(ks[2], (D_MODEL, D_MODEL)),            # sa out_proj.weight
        w(ks[3], (1, D_MODEL), 0.01),            # sa out_proj.bias
        w(ks[4], (3 * D_MODEL, D_MODEL)),        # ca in_proj_weight
        w(ks[5], (1, 3 * D_MODEL), 0.01),        # ca in_proj_bias
        w(ks[6], (D_MODEL, D_MODEL)),            # ca out_proj.weight
        w(ks[7], (1, D_MODEL), 0.01),            # ca out_proj.bias
        w(ks[8], (DIM_FF, D_MODEL)),             # linear1.weight
        w(ks[9], (1, DIM_FF), 0.01),             # linear1.bias
        w(ks[10], (D_MODEL, DIM_FF)),            # linear2.weight
        w(ks[11], (1, D_MODEL), 0.01),           # linear2.bias
        jnp.ones((1, D_MODEL), f32),             # norm1.weight
        jnp.zeros((1, D_MODEL), f32),            # norm1.bias
        jnp.ones((1, D_MODEL), f32),             # norm2.weight
        jnp.zeros((1, D_MODEL), f32),            # norm2.bias
        jnp.ones((1, D_MODEL), f32),             # norm3.weight
        jnp.zeros((1, D_MODEL), f32),            # norm3.bias
    ]


if __name__ == "__main__":
    key = jax.random.PRNGKey(0)
    k_tgt, k_mem, k_par = jax.random.split(key, 3)

    B, S_T, S_M = 2, 8, 8
    tgt = jax.random.normal(k_tgt, (B, S_T, D_MODEL), dtype=jnp.float32)
    memory = jax.random.normal(k_mem, (B, S_M, D_MODEL), dtype=jnp.float32)

    # Parameter packing hoisted out of the forward path: pack once, reuse.
    w_slab, b_slab = jax.block_until_ready(pack_params(make_params(k_par)))

    fwd = jax.jit(transformer_decoder_layer)

    # TODO(synk): tgt_mask / memory_mask / key_padding_mask not wired
    # (module defaults: None); dropout runs in eval mode (identity).
    out, cross_attn_weights = fwd(tgt, memory, w_slab, b_slab)
    jax.block_until_ready((out, cross_attn_weights))

    assert out.shape == (B, S_T, D_MODEL)
    assert cross_attn_weights.shape == (B, S_T, S_M)
    print("KERNEL_OK")
</pallas_src>

<mosaic_0001>
module attributes {stable_mosaic.version = 11 : i64} {
  func.func @decoder_layer_kernel(%arg0: i32, %arg1: memref<2x8x32xf32, #tpu.memory_space<vmem>>, %arg2: memref<2x8x32xf32, #tpu.memory_space<vmem>>, %arg3: memref<64x896xf32, #tpu.memory_space<vmem>>, %arg4: memref<16x128xf32, #tpu.memory_space<vmem>>, %arg5: memref<2x8x128xf32, #tpu.memory_space<vmem>>) attributes {dimension_semantics = [#tpu.dimension_semantics<arbitrary>], iteration_bounds = array<i64: 1>, scalar_prefetch = 0 : i64, scratch_operands = 0 : i64, tpu.core_type = #tpu.core_type<tc>, window_params = [{pipeline_mode = #tpu.pipeline_mode<synchronous>, transform_indices = @transform_0, window_bounds = array<i64: 2, 8, 32>}, {pipeline_mode = #tpu.pipeline_mode<synchronous>, transform_indices = @transform_1, window_bounds = array<i64: 2, 8, 32>}, {pipeline_mode = #tpu.pipeline_mode<synchronous>, transform_indices = @transform_2, window_bounds = array<i64: 64, 896>}, {pipeline_mode = #tpu.pipeline_mode<synchronous>, transform_indices = @transform_3, window_bounds = array<i64: 16, 128>}, {pipeline_mode = #tpu.pipeline_mode<synchronous>, transform_indices = @transform_4, window_bounds = array<i64: 2, 8, 128>}]} {
    %c0 = arith.constant 0 : index
    %c0_0 = arith.constant 0 : index
    %c0_1 = arith.constant 0 : index
    %0 = vector.load %arg1[%c0, %c0_0, %c0_1] : memref<2x8x32xf32, #tpu.memory_space<vmem>>, vector<2x8x32xf32>
    %1 = vector.shape_cast %0 : vector<2x8x32xf32> to vector<16x32xf32>
    %c0_2 = arith.constant 0 : index
    %c0_3 = arith.constant 0 : index
    %c0_4 = arith.constant 0 : index
    %2 = vector.load %arg2[%c0_2, %c0_3, %c0_4] : memref<2x8x32xf32, #tpu.memory_space<vmem>>, vector<2x8x32xf32>
    %3 = vector.shape_cast %2 : vector<2x8x32xf32> to vector<16x32xf32>
    %4 = tpu.concatenate %1, %3 in 0 : vector<16x32xf32>, vector<16x32xf32> -> vector<32x32xf32>
    %c0_5 = arith.constant 0 : index
    %c0_6 = arith.constant 0 : index
    %5 = vector.load %arg3[%c0_5, %c0_6] : memref<64x896xf32, #tpu.memory_space<vmem>>, vector<32x256xf32>
    %cst = arith.constant dense<0.000000e+00> : vector<32x256xf32>
    %6 = tpu.matmul %4, %5, %cst {dimension_numbers = #tpu.dot_dimension_numbers<[1], [0], [0], [1], [0, 0, 1, 1], [], []>} : vector<32x32xf32>, vector<32x256xf32>, vector<32x256xf32> -> vector<32x256xf32>
    %7 = vector.extract_strided_slice %6 {offsets = [0, 0], sizes = [16, 96], strides = [1, 1]} : vector<32x256xf32> to vector<16x96xf32>
    %c0_7 = arith.constant 0 : index
    %c0_8 = arith.constant 0 : index
    %8 = vector.load %arg4[%c0_7, %c0_8] : memref<16x128xf32, #tpu.memory_space<vmem>>, vector<1x96xf32>
    %9 = vector.broadcast %8 : vector<1x96xf32> to vector<16x96xf32>
    %10 = arith.addf %7, %9 : vector<16x96xf32>
    %11 = vector.extract_strided_slice %6 {offsets = [16, 128], sizes = [16, 64], strides = [1, 1]} : vector<32x256xf32> to vector<16x64xf32>
    %c3 = arith.constant 3 : index
    %c0_9 = arith.constant 0 : index
    %12 = vector.load %arg4[%c3, %c0_9] : memref<16x128xf32, #tpu.memory_space<vmem>>, vector<1x64xf32>
    %13 = vector.broadcast %12 : vector<1x64xf32> to vector<16x64xf32>
    %14 = arith.addf %11, %13 : vector<16x64xf32>
    %15 = vector.shape_cast %10 : vector<16x96xf32> to vector<2x8x96xf32>
    %16 = vector.extract_strided_slice %15 {offsets = [0, 0, 0], sizes = [2, 8, 8], strides = [1, 1, 1]} : vector<2x8x96xf32> to vector<2x8x8xf32>
    %17 = vector.extract_strided_slice %15 {offsets = [0, 0, 8], sizes = [2, 8, 8], strides = [1, 1, 1]} : vector<2x8x96xf32> to vector<2x8x8xf32>
    %18 = vector.extract_strided_slice %15 {offsets = [0, 0, 16], sizes = [2, 8, 8], strides = [1, 1, 1]} : vector<2x8x96xf32> to vector<2x8x8xf32>
    %19 = vector.extract_strided_slice %15 {offsets = [0, 0, 24], sizes = [2, 8, 8], strides = [1, 1, 1]} : vector<2x8x96xf32> to vector<2x8x8xf32>
    %20 = vector.shape_cast %16 : vector<2x8x8xf32> to vector<2x1x8x8xf32>
    %21 = vector.shape_cast %17 : vector<2x8x8xf32> to vector<2x1x8x8xf32>
    %22 = vector.shape_cast %18 : vector<2x8x8xf32> to vector<2x1x8x8xf32>
    %23 = vector.shape_cast %19 : vector<2x8x8xf32> to vector<2x1x8x8xf32>
    %24 = tpu.concatenate %20, %21, %22, %23 in 1 : vector<2x1x8x8xf32>, vector<2x1x8x8xf32>, vector<2x1x8x8xf32>, vector<2x1x8x8xf32> -> vector<2x4x8x8xf32>
    %25 = vector.shape_cast %24 : vector<2x4x8x8xf32> to vector<8x8x8xf32>
    %26 = vector.shape_cast %10 : vector<16x96xf32> to vector<2x8x96xf32>
    %27 = vector.extract_strided_slice %26 {offsets = [0, 0, 32], sizes = [2, 8, 8], strides = [1, 1, 1]} : vector<2x8x96xf32> to vector<2x8x8xf32>
    %28 = vector.extract_strided_slice %26 {offsets = [0, 0, 40], sizes = [2, 8, 8], strides = [1, 1, 1]} : vector<2x8x96xf32> to vector<2x8x8xf32>
    %29 = vector.extract_strided_slice %26 {offsets = [0, 0, 48], sizes = [2, 8, 8], strides = [1, 1, 1]} : vector<2x8x96xf32> to vector<2x8x8xf32>
    %30 = vector.extract_strided_slice %26 {offsets = [0, 0, 56], sizes = [2, 8, 8], strides = [1, 1, 1]} : vector<2x8x96xf32> to vector<2x8x8xf32>
    %31 = vector.shape_cast %27 : vector<2x8x8xf32> to vector<2x1x8x8xf32>
    %32 = vector.shape_cast %28 : vector<2x8x8xf32> to vector<2x1x8x8xf32>
    %33 = vector.shape_cast %29 : vector<2x8x8xf32> to vector<2x1x8x8xf32>
    %34 = vector.shape_cast %30 : vector<2x8x8xf32> to vector<2x1x8x8xf32>
    %35 = tpu.concatenate %31, %32, %33, %34 in 1 : vector<2x1x8x8xf32>, vector<2x1x8x8xf32>, vector<2x1x8x8xf32>, vector<2x1x8x8xf32> -> vector<2x4x8x8xf32>
    %36 = vector.shape_cast %35 : vector<2x4x8x8xf32> to vector<8x8x8xf32>
    %37 = vector.shape_cast %10 : vector<16x96xf32> to vector<2x8x96xf32>
    %38 = vector.extract_strided_slice %37 {offsets = [0, 0, 64], sizes = [2, 8, 8], strides = [1, 1, 1]} : vector<2x8x96xf32> to vector<2x8x8xf32>
    %39 = vector.extract_strided_slice %37 {offsets = [0, 0, 72], sizes = [2, 8, 8], strides = [1, 1, 1]} : vector<2x8x96xf32> to vector<2x8x8xf32>
    %40 = vector.extract_strided_slice %37 {offsets = [0, 0, 80], sizes = [2, 8, 8], strides = [1, 1, 1]} : vector<2x8x96xf32> to vector<2x8x8xf32>
    %41 = vector.extract_strided_slice %37 {offsets = [0, 0, 88], sizes = [2, 8, 8], strides = [1, 1, 1]} : vector<2x8x96xf32> to vector<2x8x8xf32>
    %42 = vector.shape_cast %38 : vector<2x8x8xf32> to vector<2x1x8x8xf32>
    %43 = vector.shape_cast %39 : vector<2x8x8xf32> to vector<2x1x8x8xf32>
    %44 = vector.shape_cast %40 : vector<2x8x8xf32> to vector<2x1x8x8xf32>
    %45 = vector.shape_cast %41 : vector<2x8x8xf32> to vector<2x1x8x8xf32>
    %46 = tpu.concatenate %42, %43, %44, %45 in 1 : vector<2x1x8x8xf32>, vector<2x1x8x8xf32>, vector<2x1x8x8xf32>, vector<2x1x8x8xf32> -> vector<2x4x8x8xf32>
    %47 = vector.shape_cast %46 : vector<2x4x8x8xf32> to vector<8x8x8xf32>
    %cst_10 = arith.constant dense<0.000000e+00> : vector<8x8x8xf32>
    %48 = tpu.matmul %25, %36, %cst_10 {dimension_numbers = #tpu.dot_dimension_numbers<[2], [2], [1], [1], [0, 0, 0, 1, 1, 1], [0], [0]>} : vector<8x8x8xf32>, vector<8x8x8xf32>, vector<8x8x8xf32> -> vector<8x8x8xf32>
    %cst_11 = arith.constant 0.353553385 : f32
    %49 = vector.broadcast %cst_11 : f32 to vector<8x8x8xf32>
    %50 = arith.mulf %48, %49 : vector<8x8x8xf32>
    %cst_12 = arith.constant dense<0xFF800000> : vector<8x8xf32>
    %51 = vector.multi_reduction <maximumf>, %50, %cst_12 [2] : vector<8x8x8xf32> to vector<8x8xf32>
    %52 = vector.shape_cast %51 : vector<8x8xf32> to vector<8x8x1xf32>
    %53 = vector.broadcast %52 : vector<8x8x1xf32> to vector<8x8x8xf32>
    %54 = arith.subf %50, %53 : vector<8x8x8xf32>
    %55 = math.exp %54 : vector<8x8x8xf32>
    %cst_13 = arith.constant dense<0.000000e+00> : vector<8x8xf32>
    %56 = vector.multi_reduction <add>, %55, %cst_13 [2] : vector<8x8x8xf32> to vector<8x8xf32>
    %57 = vector.shape_cast %56 : vector<8x8xf32> to vector<8x8x1xf32>
    %58 = tpu.reciprocal %57 {approx = true} : vector<8x8x1xf32> -> vector<8x8x1xf32>
    %59 = vector.broadcast %58 : vector<8x8x1xf32> to vector<8x8x8xf32>
    %60 = arith.mulf %55, %59 : vector<8x8x8xf32>
    %cst_14 = arith.constant dense<0.000000e+00> : vector<8x8x8xf32>
    %61 = tpu.matmul %60, %47, %cst_14 {dimension_numbers = #tpu.dot_dimension_numbers<[2], [1], [1], [2], [0, 0, 0, 1, 1, 2], [0], [0]>} : vector<8x8x8xf32>, vector<8x8x8xf32>, vector<8x8x8xf32> -> vector<8x8x8xf32>
    %62 = vector.shape_cast %61 : vector<8x8x8xf32> to vector<2x4x8x8xf32>
    %63 = vector.extract_strided_slice %62 {offsets = [0, 0, 0, 0], sizes = [2, 1, 8, 8], strides = [1, 1, 1, 1]} : vector<2x4x8x8xf32> to vector<2x1x8x8xf32>
    %64 = vector.shape_cast %63 : vector<2x1x8x8xf32> to vector<2x8x8xf32>
    %65 = vector.extract_strided_slice %62 {offsets = [0, 1, 0, 0], sizes = [2, 1, 8, 8], strides = [1, 1, 1, 1]} : vector<2x4x8x8xf32> to vector<2x1x8x8xf32>
    %66 = vector.shape_cast %65 : vector<2x1x8x8xf32> to vector<2x8x8xf32>
    %67 = vector.extract_strided_slice %62 {offsets = [0, 2, 0, 0], sizes = [2, 1, 8, 8], strides = [1, 1, 1, 1]} : vector<2x4x8x8xf32> to vector<2x1x8x8xf32>
    %68 = vector.shape_cast %67 : vector<2x1x8x8xf32> to vector<2x8x8xf32>
    %69 = vector.extract_strided_slice %62 {offsets = [0, 3, 0, 0], sizes = [2, 1, 8, 8], strides = [1, 1, 1, 1]} : vector<2x4x8x8xf32> to vector<2x1x8x8xf32>
    %70 = vector.shape_cast %69 : vector<2x1x8x8xf32> to vector<2x8x8xf32>
    %71 = tpu.concatenate %64, %66, %68, %70 in 2 : vector<2x8x8xf32>, vector<2x8x8xf32>, vector<2x8x8xf32>, vector<2x8x8xf32> -> vector<2x8x32xf32>
    %72 = vector.shape_cast %71 : vector<2x8x32xf32> to vector<16x32xf32>
    %c0_15 = arith.constant 0 : index
    %c256 = arith.constant 256 : index
    %73 = vector.load %arg3[%c0_15, %c256] : memref<64x896xf32, #tpu.memory_space<vmem>>, vector<32x32xf32>
    %cst_16 = arith.constant dense<0.000000e+00> : vector<16x32xf32>
    %74 = tpu.matmul %72, %73, %cst_16 {dimension_numbers = #tpu.dot_dimension_numbers<[1], [0], [0], [1], [0, 0, 1, 1], [], []>} : vector<16x32xf32>, vector<32x32xf32>, vector<16x32xf32> -> vector<16x32xf32>
    %c1 = arith.constant 1 : index
    %c0_17 = arith.constant 0 : index
    %75 = vector.load %arg4[%c1, %c0_17] : memref<16x128xf32, #tpu.memory_space<vmem>>, vector<1x32xf32>
    %76 = vector.broadcast %75 : vector<1x32xf32> to vector<16x32xf32>
    %77 = arith.addf %74, %76 : vector<16x32xf32>
    %78 = arith.addf %1, %77 : vector<16x32xf32>
    %c7 = arith.constant 7 : index
    %c0_18 = arith.constant 0 : index
    %79 = vector.load %arg4[%c7, %c0_18] : memref<16x128xf32, #tpu.memory_space<vmem>>, vector<1x32xf32>
    %c8 = arith.constant 8 : index
    %c0_19 = arith.constant 0 : index
    %80 = vector.load %arg4[%c8, %c0_19] : memref<16x128xf32, #tpu.memory_space<vmem>>, vector<1x32xf32>
    %cst_20 = arith.constant dense<0.000000e+00> : vector<16xf32>
    %81 = vector.multi_reduction <add>, %78, %cst_20 [1] : vector<16x32xf32> to vector<16xf32>
    %82 = vector.shape_cast %81 : vector<16xf32> to vector<16x1xf32>
    %cst_21 = arith.constant 3.200000e+01 : f32
    %83 = vector.broadcast %cst_21 : f32 to vector<16x1xf32>
    %84 = arith.divf %82, %83 : vector<16x1xf32>
    %85 = vector.broadcast %84 : vector<16x1xf32> to vector<16x32xf32>
    %86 = arith.subf %78, %85 : vector<16x32xf32>
    %87 = arith.mulf %86, %86 : vector<16x32xf32>
    %cst_22 = arith.constant dense<0.000000e+00> : vector<16xf32>
    %88 = vector.multi_reduction <add>, %87, %cst_22 [1] : vector<16x32xf32> to vector<16xf32>
    %89 = vector.shape_cast %88 : vector<16xf32> to vector<16x1xf32>
    %cst_23 = arith.constant 3.200000e+01 : f32
    %90 = vector.broadcast %cst_23 : f32 to vector<16x1xf32>
    %91 = arith.divf %89, %90 : vector<16x1xf32>
    %92 = vector.broadcast %84 : vector<16x1xf32> to vector<16x32xf32>
    %93 = arith.subf %78, %92 : vector<16x32xf32>
    %cst_24 = arith.constant 9.99999974E-6 : f32
    %94 = vector.broadcast %cst_24 : f32 to vector<16x1xf32>
    %95 = arith.addf %91, %94 : vector<16x1xf32>
    %96 = math.rsqrt %95 : vector<16x1xf32>
    %97 = vector.broadcast %96 : vector<16x1xf32> to vector<16x32xf32>
    %98 = arith.mulf %93, %97 : vector<16x32xf32>
    %99 = vector.broadcast %79 : vector<1x32xf32> to vector<16x32xf32>
    %100 = arith.mulf %98, %99 : vector<16x32xf32>
    %101 = vector.broadcast %80 : vector<1x32xf32> to vector<16x32xf32>
    %102 = arith.addf %100, %101 : vector<16x32xf32>
    %c0_25 = arith.constant 0 : index
    %c384 = arith.constant 384 : index
    %103 = vector.load %arg3[%c0_25, %c384] : memref<64x896xf32, #tpu.memory_space<vmem>>, vector<32x32xf32>
    %cst_26 = arith.constant dense<0.000000e+00> : vector<16x32xf32>
    %104 = tpu.matmul %102, %103, %cst_26 {dimension_numbers = #tpu.dot_dimension_numbers<[1], [0], [0], [1], [0, 0, 1, 1], [], []>} : vector<16x32xf32>, vector<32x32xf32>, vector<16x32xf32> -> vector<16x32xf32>
    %c2 = arith.constant 2 : index
    %c0_27 = arith.constant 0 : index
    %105 = vector.load %arg4[%c2, %c0_27] : memref<16x128xf32, #tpu.memory_space<vmem>>, vector<1x32xf32>
    %106 = vector.broadcast %105 : vector<1x32xf32> to vector<16x32xf32>
    %107 = arith.addf %104, %106 : vector<16x32xf32>
    %108 = vector.shape_cast %107 : vector<16x32xf32> to vector<2x8x32xf32>
    %109 = vector.extract_strided_slice %108 {offsets = [0, 0, 0], sizes = [2, 8, 8], strides = [1, 1, 1]} : vector<2x8x32xf32> to vector<2x8x8xf32>
    %110 = vector.extract_strided_slice %108 {offsets = [0, 0, 8], sizes = [2, 8, 8], strides = [1, 1, 1]} : vector<2x8x32xf32> to vector<2x8x8xf32>
    %111 = vector.extract_strided_slice %108 {offsets = [0, 0, 16], sizes = [2, 8, 8], strides = [1, 1, 1]} : vector<2x8x32xf32> to vector<2x8x8xf32>
    %112 = vector.extract_strided_slice %108 {offsets = [0, 0, 24], sizes = [2, 8, 8], strides = [1, 1, 1]} : vector<2x8x32xf32> to vector<2x8x8xf32>
    %113 = vector.shape_cast %109 : vector<2x8x8xf32> to vector<2x1x8x8xf32>
    %114 = vector.shape_cast %110 : vector<2x8x8xf32> to vector<2x1x8x8xf32>
    %115 = vector.shape_cast %111 : vector<2x8x8xf32> to vector<2x1x8x8xf32>
    %116 = vector.shape_cast %112 : vector<2x8x8xf32> to vector<2x1x8x8xf32>
    %117 = tpu.concatenate %113, %114, %115, %116 in 1 : vector<2x1x8x8xf32>, vector<2x1x8x8xf32>, vector<2x1x8x8xf32>, vector<2x1x8x8xf32> -> vector<2x4x8x8xf32>
    %118 = vector.shape_cast %117 : vector<2x4x8x8xf32> to vector<8x8x8xf32>
    %119 = vector.shape_cast %14 : vector<16x64xf32> to vector<2x8x64xf32>
    %120 = vector.extract_strided_slice %119 {offsets = [0, 0, 0], sizes = [2, 8, 8], strides = [1, 1, 1]} : vector<2x8x64xf32> to vector<2x8x8xf32>
    %121 = vector.extract_strided_slice %119 {offsets = [0, 0, 8], sizes = [2, 8, 8], strides = [1, 1, 1]} : vector<2x8x64xf32> to vector<2x8x8xf32>
    %122 = vector.extract_strided_slice %119 {offsets = [0, 0, 16], sizes = [2, 8, 8], strides = [1, 1, 1]} : vector<2x8x64xf32> to vector<2x8x8xf32>
    %123 = vector.extract_strided_slice %119 {offsets = [0, 0, 24], sizes = [2, 8, 8], strides = [1, 1, 1]} : vector<2x8x64xf32> to vector<2x8x8xf32>
    %124 = vector.shape_cast %120 : vector<2x8x8xf32> to vector<2x1x8x8xf32>
    %125 = vector.shape_cast %121 : vector<2x8x8xf32> to vector<2x1x8x8xf32>
    %126 = vector.shape_cast %122 : vector<2x8x8xf32> to vector<2x1x8x8xf32>
    %127 = vector.shape_cast %123 : vector<2x8x8xf32> to vector<2x1x8x8xf32>
    %128 = tpu.concatenate %124, %125, %126, %127 in 1 : vector<2x1x8x8xf32>, vector<2x1x8x8xf32>, vector<2x1x8x8xf32>, vector<2x1x8x8xf32> -> vector<2x4x8x8xf32>
    %129 = vector.shape_cast %128 : vector<2x4x8x8xf32> to vector<8x8x8xf32>
    %130 = vector.shape_cast %14 : vector<16x64xf32> to vector<2x8x64xf32>
    %131 = vector.extract_strided_slice %130 {offsets = [0, 0, 32], sizes = [2, 8, 8], strides = [1, 1, 1]} : vector<2x8x64xf32> to vector<2x8x8xf32>
    %132 = vector.extract_strided_slice %130 {offsets = [0, 0, 40], sizes = [2, 8, 8], strides = [1, 1, 1]} : vector<2x8x64xf32> to vector<2x8x8xf32>
    %133 = vector.extract_strided_slice %130 {offsets = [0, 0, 48], sizes = [2, 8, 8], strides = [1, 1, 1]} : vector<2x8x64xf32> to vector<2x8x8xf32>
    %134 = vector.extract_strided_slice %130 {offsets = [0, 0, 56], sizes = [2, 8, 8], strides = [1, 1, 1]} : vector<2x8x64xf32> to vector<2x8x8xf32>
    %135 = vector.shape_cast %131 : vector<2x8x8xf32> to vector<2x1x8x8xf32>
    %136 = vector.shape_cast %132 : vector<2x8x8xf32> to vector<2x1x8x8xf32>
    %137 = vector.shape_cast %133 : vector<2x8x8xf32> to vector<2x1x8x8xf32>
    %138 = vector.shape_cast %134 : vector<2x8x8xf32> to vector<2x1x8x8xf32>
    %139 = tpu.concatenate %135, %136, %137, %138 in 1 : vector<2x1x8x8xf32>, vector<2x1x8x8xf32>, vector<2x1x8x8xf32>, vector<2x1x8x8xf32> -> vector<2x4x8x8xf32>
    %140 = vector.shape_cast %139 : vector<2x4x8x8xf32> to vector<8x8x8xf32>
    %cst_28 = arith.constant dense<0.000000e+00> : vector<8x8x8xf32>
    %141 = tpu.matmul %118, %129, %cst_28 {dimension_numbers = #tpu.dot_dimension_numbers<[2], [2], [1], [1], [0, 0, 0, 1, 1, 1], [0], [0]>} : vector<8x8x8xf32>, vector<8x8x8xf32>, vector<8x8x8xf32> -> vector<8x8x8xf32>
    %cst_29 = arith.constant 0.353553385 : f32
    %142 = vector.broadcast %cst_29 : f32 to vector<8x8x8xf32>
    %143 = arith.mulf %141, %142 : vector<8x8x8xf32>
    %cst_30 = arith.constant dense<0xFF800000> : vector<8x8xf32>
    %144 = vector.multi_reduction <maximumf>, %143, %cst_30 [2] : vector<8x8x8xf32> to vector<8x8xf32>
    %145 = vector.shape_cast %144 : vector<8x8xf32> to vector<8x8x1xf32>
    %146 = vector.broadcast %145 : vector<8x8x1xf32> to vector<8x8x8xf32>
    %147 = arith.subf %143, %146 : vector<8x8x8xf32>
    %148 = math.exp %147 : vector<8x8x8xf32>
    %cst_31 = arith.constant dense<0.000000e+00> : vector<8x8xf32>
    %149 = vector.multi_reduction <add>, %148, %cst_31 [2] : vector<8x8x8xf32> to vector<8x8xf32>
    %150 = vector.shape_cast %149 : vector<8x8xf32> to vector<8x8x1xf32>
    %151 = vector.broadcast %150 : vector<8x8x1xf32> to vector<8x8x8xf32>
    %152 = arith.divf %148, %151 : vector<8x8x8xf32>
    %cst_32 = arith.constant dense<0.000000e+00> : vector<8x8x8xf32>
    %153 = tpu.matmul %152, %140, %cst_32 {dimension_numbers = #tpu.dot_dimension_numbers<[2], [1], [1], [2], [0, 0, 0, 1, 1, 2], [0], [0]>} : vector<8x8x8xf32>, vector<8x8x8xf32>, vector<8x8x8xf32> -> vector<8x8x8xf32>
    %154 = vector.shape_cast %153 : vector<8x8x8xf32> to vector<2x4x8x8xf32>
    %155 = vector.extract_strided_slice %154 {offsets = [0, 0, 0, 0], sizes = [2, 1, 8, 8], strides = [1, 1, 1, 1]} : vector<2x4x8x8xf32> to vector<2x1x8x8xf32>
    %156 = vector.shape_cast %155 : vector<2x1x8x8xf32> to vector<2x8x8xf32>
    %157 = vector.extract_strided_slice %154 {offsets = [0, 1, 0, 0], sizes = [2, 1, 8, 8], strides = [1, 1, 1, 1]} : vector<2x4x8x8xf32> to vector<2x1x8x8xf32>
    %158 = vector.shape_cast %157 : vector<2x1x8x8xf32> to vector<2x8x8xf32>
    %159 = vector.extract_strided_slice %154 {offsets = [0, 2, 0, 0], sizes = [2, 1, 8, 8], strides = [1, 1, 1, 1]} : vector<2x4x8x8xf32> to vector<2x1x8x8xf32>
    %160 = vector.shape_cast %159 : vector<2x1x8x8xf32> to vector<2x8x8xf32>
    %161 = vector.extract_strided_slice %154 {offsets = [0, 3, 0, 0], sizes = [2, 1, 8, 8], strides = [1, 1, 1, 1]} : vector<2x4x8x8xf32> to vector<2x1x8x8xf32>
    %162 = vector.shape_cast %161 : vector<2x1x8x8xf32> to vector<2x8x8xf32>
    %163 = tpu.concatenate %156, %158, %160, %162 in 2 : vector<2x8x8xf32>, vector<2x8x8xf32>, vector<2x8x8xf32>, vector<2x8x8xf32> -> vector<2x8x32xf32>
    %164 = vector.shape_cast %163 : vector<2x8x32xf32> to vector<16x32xf32>
    %c0_33 = arith.constant 0 : index
    %c512 = arith.constant 512 : index
    %165 = vector.load %arg3[%c0_33, %c512] : memref<64x896xf32, #tpu.memory_space<vmem>>, vector<32x32xf32>
    %cst_34 = arith.constant dense<0.000000e+00> : vector<16x32xf32>
    %166 = tpu.matmul %164, %165, %cst_34 {dimension_numbers = #tpu.dot_dimension_numbers<[1], [0], [0], [1], [0, 0, 1, 1], [], []>} : vector<16x32xf32>, vector<32x32xf32>, vector<16x32xf32> -> vector<16x32xf32>
    %c4 = arith.constant 4 : index
    %c0_35 = arith.constant 0 : index
    %167 = vector.load %arg4[%c4, %c0_35] : memref<16x128xf32, #tpu.memory_space<vmem>>, vector<1x32xf32>
    %168 = vector.broadcast %167 : vector<1x32xf32> to vector<16x32xf32>
    %169 = arith.addf %166, %168 : vector<16x32xf32>
    %170 = vector.shape_cast %152 : vector<8x8x8xf32> to vector<2x4x8x8xf32>
    %cst_36 = arith.constant dense<0.000000e+00> : vector<2x8x8xf32>
    %171 = vector.multi_reduction <add>, %170, %cst_36 [1] : vector<2x4x8x8xf32> to vector<2x8x8xf32>
    %cst_37 = arith.constant 4.000000e+00 : f32
    %172 = vector.broadcast %cst_37 : f32 to vector<2x8x8xf32>
    %173 = arith.divf %171, %172 : vector<2x8x8xf32>
    %174 = arith.addf %102, %169 : vector<16x32xf32>
    %c9 = arith.constant 9 : index
    %c0_38 = arith.constant 0 : index
    %175 = vector.load %arg4[%c9, %c0_38] : memref<16x128xf32, #tpu.memory_space<vmem>>, vector<1x32xf32>
    %c10 = arith.constant 10 : index
    %c0_39 = arith.constant 0 : index
    %176 = vector.load %arg4[%c10, %c0_39] : memref<16x128xf32, #tpu.memory_space<vmem>>, vector<1x32xf32>
    %cst_40 = arith.constant dense<0.000000e+00> : vector<16xf32>
    %177 = vector.multi_reduction <add>, %174, %cst_40 [1] : vector<16x32xf32> to vector<16xf32>
    %178 = vector.shape_cast %177 : vector<16xf32> to vector<16x1xf32>
    %cst_41 = arith.constant 3.200000e+01 : f32
    %179 = vector.broadcast %cst_41 : f32 to vector<16x1xf32>
    %180 = arith.divf %178, %179 : vector<16x1xf32>
    %181 = vector.broadcast %180 : vector<16x1xf32> to vector<16x32xf32>
    %182 = arith.subf %174, %181 : vector<16x32xf32>
    %183 = arith.mulf %182, %182 : vector<16x32xf32>
    %cst_42 = arith.constant dense<0.000000e+00> : vector<16xf32>
    %184 = vector.multi_reduction <add>, %183, %cst_42 [1] : vector<16x32xf32> to vector<16xf32>
    %185 = vector.shape_cast %184 : vector<16xf32> to vector<16x1xf32>
    %cst_43 = arith.constant 3.200000e+01 : f32
    %186 = vector.broadcast %cst_43 : f32 to vector<16x1xf32>
    %187 = arith.divf %185, %186 : vector<16x1xf32>
    %188 = vector.broadcast %180 : vector<16x1xf32> to vector<16x32xf32>
    %189 = arith.subf %174, %188 : vector<16x32xf32>
    %cst_44 = arith.constant 9.99999974E-6 : f32
    %190 = vector.broadcast %cst_44 : f32 to vector<16x1xf32>
    %191 = arith.addf %187, %190 : vector<16x1xf32>
    %192 = math.rsqrt %191 : vector<16x1xf32>
    %193 = vector.broadcast %192 : vector<16x1xf32> to vector<16x32xf32>
    %194 = arith.mulf %189, %193 : vector<16x32xf32>
    %195 = vector.broadcast %175 : vector<1x32xf32> to vector<16x32xf32>
    %196 = arith.mulf %194, %195 : vector<16x32xf32>
    %197 = vector.broadcast %176 : vector<1x32xf32> to vector<16x32xf32>
    %198 = arith.addf %196, %197 : vector<16x32xf32>
    %c0_45 = arith.constant 0 : index
    %c640 = arith.constant 640 : index
    %199 = vector.load %arg3[%c0_45, %c640] : memref<64x896xf32, #tpu.memory_space<vmem>>, vector<32x64xf32>
    %cst_46 = arith.constant dense<0.000000e+00> : vector<16x64xf32>
    %200 = tpu.matmul %198, %199, %cst_46 {dimension_numbers = #tpu.dot_dimension_numbers<[1], [0], [0], [1], [0, 0, 1, 1], [], []>} : vector<16x32xf32>, vector<32x64xf32>, vector<16x64xf32> -> vector<16x64xf32>
    %c5 = arith.constant 5 : index
    %c0_47 = arith.constant 0 : index
    %201 = vector.load %arg4[%c5, %c0_47] : memref<16x128xf32, #tpu.memory_space<vmem>>, vector<1x64xf32>
    %202 = vector.broadcast %201 : vector<1x64xf32> to vector<16x64xf32>
    %203 = arith.addf %200, %202 : vector<16x64xf32>
    %cst_48 = arith.constant 0.000000e+00 : f32
    %204 = vector.broadcast %cst_48 : f32 to vector<16x64xf32>
    %205 = arith.maximumf %203, %204 : vector<16x64xf32>
    %c0_49 = arith.constant 0 : index
    %c768 = arith.constant 768 : index
    %206 = vector.load %arg3[%c0_49, %c768] : memref<64x896xf32, #tpu.memory_space<vmem>>, vector<64x32xf32>
    %cst_50 = arith.constant dense<0.000000e+00> : vector<16x32xf32>
    %207 = tpu.matmul %205, %206, %cst_50 {dimension_numbers = #tpu.dot_dimension_numbers<[1], [0], [0], [1], [0, 0, 1, 1], [], []>} : vector<16x64xf32>, vector<64x32xf32>, vector<16x32xf32> -> vector<16x32xf32>
    %c6 = arith.constant 6 : index
    %c0_51 = arith.constant 0 : index
    %208 = vector.load %arg4[%c6, %c0_51] : memref<16x128xf32, #tpu.memory_space<vmem>>, vector<1x32xf32>
    %209 = vector.broadcast %208 : vector<1x32xf32> to vector<16x32xf32>
    %210 = arith.addf %207, %209 : vector<16x32xf32>
    %211 = arith.addf %198, %210 : vector<16x32xf32>
    %c11 = arith.constant 11 : index
    %c0_52 = arith.constant 0 : index
    %212 = vector.load %arg4[%c11, %c0_52] : memref<16x128xf32, #tpu.memory_space<vmem>>, vector<1x32xf32>
    %c12 = arith.constant 12 : index
    %c0_53 = arith.constant 0 : index
    %213 = vector.load %arg4[%c12, %c0_53] : memref<16x128xf32, #tpu.memory_space<vmem>>, vector<1x32xf32>
    %cst_54 = arith.constant dense<0.000000e+00> : vector<16xf32>
    %214 = vector.multi_reduction <add>, %211, %cst_54 [1] : vector<16x32xf32> to vector<16xf32>
    %215 = vector.shape_cast %214 : vector<16xf32> to vector<16x1xf32>
    %cst_55 = arith.constant 3.200000e+01 : f32
    %216 = vector.broadcast %cst_55 : f32 to vector<16x1xf32>
    %217 = arith.divf %215, %216 : vector<16x1xf32>
    %218 = vector.broadcast %217 : vector<16x1xf32> to vector<16x32xf32>
    %219 = arith.subf %211, %218 : vector<16x32xf32>
    %220 = arith.mulf %219, %219 : vector<16x32xf32>
    %cst_56 = arith.constant dense<0.000000e+00> : vector<16xf32>
    %221 = vector.multi_reduction <add>, %220, %cst_56 [1] : vector<16x32xf32> to vector<16xf32>
    %222 = vector.shape_cast %221 : vector<16xf32> to vector<16x1xf32>
    %cst_57 = arith.constant 3.200000e+01 : f32
    %223 = vector.broadcast %cst_57 : f32 to vector<16x1xf32>
    %224 = arith.divf %222, %223 : vector<16x1xf32>
    %225 = vector.broadcast %217 : vector<16x1xf32> to vector<16x32xf32>
    %226 = arith.subf %211, %225 : vector<16x32xf32>
    %cst_58 = arith.constant 9.99999974E-6 : f32
    %227 = vector.broadcast %cst_58 : f32 to vector<16x1xf32>
    %228 = arith.addf %224, %227 : vector<16x1xf32>
    %229 = math.rsqrt %228 : vector<16x1xf32>
    %230 = vector.broadcast %229 : vector<16x1xf32> to vector<16x32xf32>
    %231 = arith.mulf %226, %230 : vector<16x32xf32>
    %232 = vector.broadcast %212 : vector<1x32xf32> to vector<16x32xf32>
    %233 = arith.mulf %231, %232 : vector<16x32xf32>
    %234 = vector.broadcast %213 : vector<1x32xf32> to vector<16x32xf32>
    %235 = arith.addf %233, %234 : vector<16x32xf32>
    %236 = vector.shape_cast %235 : vector<16x32xf32> to vector<2x8x32xf32>
    %c0_59 = arith.constant 0 : index
    %c0_60 = arith.constant 0 : index
    %c0_61 = arith.constant 0 : index
    %237 = vector.load %arg5[%c0_59, %c0_60, %c0_61] : memref<2x8x128xf32, #tpu.memory_space<vmem>>, vector<2x8x32xf32>
    tpu.vector_store %arg5[%c0_59, %c0_60, %c0_61], %236 {strides = array<i32>} : memref<2x8x128xf32, #tpu.memory_space<vmem>>, vector<2x8x32xf32>,
    %c0_62 = arith.constant 0 : index
    %c0_63 = arith.constant 0 : index
    %c32 = arith.constant 32 : index
    %238 = vector.load %arg5[%c0_62, %c0_63, %c32] : memref<2x8x128xf32, #tpu.memory_space<vmem>>, vector<2x8x8xf32>
    tpu.vector_store %arg5[%c0_62, %c0_63, %c32], %173 {strides = array<i32>} : memref<2x8x128xf32, #tpu.memory_space<vmem>>, vector<2x8x8xf32>,
    return
  }
  func.func @transform_0(%arg0: i32) -> (i32, i32, i32) {
    %c0_i32 = arith.constant 0 : i32
    %c0_i32_0 = arith.constant 0 : i32
    %c0_i32_1 = arith.constant 0 : i32
    %c0_i32_2 = arith.constant 0 : i32
    return %c0_i32, %c0_i32_0, %c0_i32_1 : i32, i32, i32
  }
  func.func @transform_1(%arg0: i32) -> (i32, i32, i32) {
    %c0_i32 = arith.constant 0 : i32
    %c0_i32_0 = arith.constant 0 : i32
    %c0_i32_1 = arith.constant 0 : i32
    %c0_i32_2 = arith.constant 0 : i32
    return %c0_i32, %c0_i32_0, %c0_i32_1 : i32, i32, i32
  }
  func.func @transform_2(%arg0: i32) -> (i32, i32) {
    %c0_i32 = arith.constant 0 : i32
    %c0_i32_0 = arith.constant 0 : i32
    %c0_i32_1 = arith.constant 0 : i32
    return %c0_i32, %c0_i32_0 : i32, i32
  }
  func.func @transform_3(%arg0: i32) -> (i32, i32) {
    %c0_i32 = arith.constant 0 : i32
    %c0_i32_0 = arith.constant 0 : i32
    %c0_i32_1 = arith.constant 0 : i32
    return %c0_i32, %c0_i32_0 : i32, i32
  }
  func.func @transform_4(%arg0: i32) -> (i32, i32, i32) {
    %c0_i32 = arith.constant 0 : i32
    %c0_i32_0 = arith.constant 0 : i32
    %c0_i32_1 = arith.constant 0 : i32
    %c0_i32_2 = arith.constant 0 : i32
    return %c0_i32, %c0_i32_0, %c0_i32_1 : i32, i32, i32
  }
}

</mosaic_0001>

<llo_original>
// kernel: transformer_decoder_layer.1
$region0: #{transformer_decoder_layer.1}
  #allocation0 [shape = 'u32[]', space=smem, size = 0x4, offset = 0x4, fixed_abs, tag = 'smem constant byte address 0x4 - core index']
  #allocation1 [shape = 'u32[72,128]{1,0:T(1,128)}', space=vmem, size = 0x9000, scoped, tag = 'internal scratch']
  %s0 = inlined_call_operand.hbm [shape: f32[2,8,32], index: 0, kind: input, shape index: {}]
  %s1 = inlined_call_operand.hbm [shape: f32[2,8,32], index: 1, kind: input, shape index: {}]
  %s2 = inlined_call_operand.hbm [shape: f32[64,896], index: 2, kind: input, shape index: {}]
  %s3 = inlined_call_operand.hbm [shape: f32[16,128], index: 3, kind: input, shape index: {}]
  %s4 = inlined_call_operand.vmem [shape: f32[2,8,128], index: 4, kind: output, shape index: {}]
  %s5 = sld [smem:[#allocation0]]
  $region42: #{transformer_decoder_layer.1} parent=0
    _
  %s7 = ssub.s32 1, %s5
  %s8 = scalar_select 0, %s7, %s5
  $region1: #{transformer_decoder_layer.1} parent=0
    #allocation2 [shape = 'u8[8192]{0}', space=vmem, size = 0x2000, scoped, tag = 'input window, operand 0, single buffered']
    #allocation3 [shape = 's32[1]{0}', space=sflag, size = 0x4, scoped, tag = 'scoped memory for transformer_decoder_layer.1']
    #allocation4 [shape = 'u8[8192]{0}', space=vmem, size = 0x2000, scoped, tag = 'input window, operand 1, single buffered']
    #allocation5 [shape = 's32[1]{0}', space=sflag, size = 0x4, scoped, tag = 'scoped memory for transformer_decoder_layer.1']
    #allocation6 [shape = 'u8[229376]{0}', space=vmem, size = 0x38000, scoped, tag = 'input window, operand 2, single buffered']
    #allocation7 [shape = 'u8[8192]{0}', space=vmem, size = 0x2000, scoped, tag = 'input window, operand 3, single buffered']
    #allocation8 [shape = 's32[1]{0}', space=sflag, size = 0x4, scoped, tag = 'scoped memory for transformer_decoder_layer.1']
    %9 = vsyncpa [#allocation3], 0
    %10 = vsyncpa [#allocation5], 0
    %11 = vsyncpa [#allocation8], 0
    // Predicated region
    $region2: #{transformer_decoder_layer.1} parent=1 // pred_check
      _
    $region3: #{transformer_decoder_layer.1} parent=1 // pred_check_branch
      %13 = sbr.rel (0) target = $region5
    $region4: #{transformer_decoder_layer.1} parent=1 // pred_region
      %15 = vsyncadd [#allocation3], 0
      %s16 = sshll.u32 %s0, 4
      %s17 = int_to_ptr.hbm [resolvable:$true] %s16
      %s18 = sshll.u32 [#allocation2], 4
      %s19 = int_to_ptr.vmem [resolvable:$true] %s18
      %24 = dma.hbm_to_vmem [thread:$0]  %s17, 256, %s19, [#allocation3], 128, 128, 8
    $region5: #{transformer_decoder_layer.1} parent=1 // pred_fallthru
      _
    // Predicated region
    $region6: #{transformer_decoder_layer.1} parent=1 // pred_check
      _
    $region7: #{transformer_decoder_layer.1} parent=1 // pred_check_branch
      %26 = sbr.rel (0) target = $region9
    $region8: #{transformer_decoder_layer.1} parent=1 // pred_region
      %28 = vsyncadd [#allocation5], 0
      %s29 = sshll.u32 %s1, 4
      %s30 = int_to_ptr.hbm [resolvable:$true] %s29
      %s31 = sshll.u32 [#allocation4], 4
      %s32 = int_to_ptr.vmem [resolvable:$true] %s31
      %37 = dma.hbm_to_vmem [thread:$0]  %s30, 256, %s32, [#allocation5], 128, 128, 8
    $region9: #{transformer_decoder_layer.1} parent=1 // pred_fallthru
      _
    // Predicated region
    $region10: #{transformer_decoder_layer.1} parent=1 // pred_check
      _
    $region11: #{transformer_decoder_layer.1} parent=1 // pred_check_branch
      %39 = sbr.rel (0) target = $region13
    $region12: #{transformer_decoder_layer.1} parent=1 // pred_region
      %41 = vsyncadd [#allocation5], 0
      %s42 = sshll.u32 %s2, 4
      %s43 = int_to_ptr.hbm [resolvable:$true] %s42
      %s44 = sshll.u32 [#allocation6], 4
      %s45 = int_to_ptr.vmem [resolvable:$true] %s44
      %50 = dma.hbm_to_vmem [thread:$0]  %s43, 7168, %s45, [#allocation5], 896, 896, 56
    $region13: #{transformer_decoder_layer.1} parent=1 // pred_fallthru
      _
    // Predicated region
    $region14: #{transformer_decoder_layer.1} parent=1 // pred_check
      _
    $region15: #{transformer_decoder_layer.1} parent=1 // pred_check_branch
      %52 = sbr.rel (0) target = $region17
    $region16: #{transformer_decoder_layer.1} parent=1 // pred_region
      %54 = vsyncadd [#allocation8], 0
      %s55 = sshll.u32 %s3, 4
      %s56 = int_to_ptr.hbm [resolvable:$true] %s55
      %s57 = sshll.u32 [#allocation7], 4
      %s58 = int_to_ptr.vmem [resolvable:$true] %s57
      %63 = dma.hbm_to_vmem [thread:$0]  %s56, 256, %s58, [#allocation8], 128, 128, 8
    $region17: #{transformer_decoder_layer.1} parent=1 // pred_fallthru
      _
    // Predicated region
    $region18: #{transformer_decoder_layer.1} parent=1 // pred_check
      _
    $region19: #{transformer_decoder_layer.1} parent=1 // pred_check_branch
      %65 = sbr.rel (0) target = $region21
    $region20: #{transformer_decoder_layer.1} parent=1 // pred_region
      %67 = dma.done [#allocation3], 256
    $region21: #{transformer_decoder_layer.1} parent=1 // pred_fallthru
      _
    // Predicated region
    $region22: #{transformer_decoder_layer.1} parent=1 // pred_check
      _
    $region23: #{transformer_decoder_layer.1} parent=1 // pred_check_branch
      %69 = sbr.rel (0) target = $region25
    $region24: #{transformer_decoder_layer.1} parent=1 // pred_region
      %71 = dma.done [#allocation5], 256
    $region25: #{transformer_decoder_layer.1} parent=1 // pred_fallthru
      _
    // Predicated region
    $region26: #{transformer_decoder_layer.1} parent=1 // pred_check
      _
    $region27: #{transformer_decoder_layer.1} parent=1 // pred_check_branch
      %73 = sbr.rel (0) target = $region29
    $region28: #{transformer_decoder_layer.1} parent=1 // pred_region
      %75 = dma.done [#allocation5], 7168
    $region29: #{transformer_decoder_layer.1} parent=1 // pred_fallthru
      _
    // Predicated region
    $region30: #{transformer_decoder_layer.1} parent=1 // pred_check
      _
    $region31: #{transformer_decoder_layer.1} parent=1 // pred_check_branch
      %77 = sbr.rel (0) target = $region33
    $region32: #{transformer_decoder_layer.1} parent=1 // pred_region
      %79 = dma.done [#allocation8], 256
    $region33: #{transformer_decoder_layer.1} parent=1 // pred_fallthru
      _
    %v80 = vld [vmem:[#allocation2] sm:$0xff]
    %v81 = vld [vmem:[#allocation2 + $0x8] sm:$0xff]
    %v82 = vld [vmem:[#allocation4] sm:$0xff]
    %v83 = vld [vmem:[#allocation4 + $0x8] sm:$0xff]
    %v84 = vld [vmem:[#allocation6] sm:$0xff]
    %v85 = vld [vmem:[#allocation6 + $0x8] sm:$0xff]
    %v86 = vld [vmem:[#allocation6 + $0x38] sm:$0xff]
    %v87 = vld [vmem:[#allocation6 + $0x40] sm:$0xff]
    %v88 = vld [vmem:[#allocation6 + $0x70] sm:$0xff]
    %v89 = vld [vmem:[#allocation6 + $0x78] sm:$0xff]
    %v90 = vld [vmem:[#allocation6 + $0xa8] sm:$0xff]
    %v91 = vld [vmem:[#allocation6 + $0xb0] sm:$0xff]
    %vm92 = vcmask 261120
    %v94 = vsel %vm92, %v80, 0
    %v97 = vsel %vm92, %v81, 0
    %v100 = vsel %vm92, %v82, 0
    %v103 = vsel %vm92, %v83, 0
    %105 = vmatpush.msra.mxu0 0.0
    %106 = vmatpush.msra.mxu0 0.0
    %107 = vmatpush.msra.mxu0 0.0
    %108 = vmatpush.msra.mxu0 0.0
    %109 = vmatpush.msra.mxu0 0.0
    %110 = vmatpush.msra.mxu0 0.0
    %111 = vmatpush.msra.mxu0 0.0
    %112 = vmatpush.msra.mxu0 0.0
    %113 = vmatpush.msra.mxu0 0.0
    %114 = vmatpush.msra.mxu0 0.0
    %115 = vmatpush.msra.mxu0 0.0
    %116 = vmatpush.msra.mxu0 0.0
    %117 = vmatpush.msra.mxu0 %v90
    %118 = vmatpush.msra.mxu0 %v88
    %119 = vmatpush.msra.mxu0 %v86
    %120 = vmatpush.msra.mxu0 %v84
    %121 = vmatmul.f32.gmra.mxu0 %v94
    %v122 = vpop.f32.mrf.mxu0
    %v123 = vadd.f32 0.0, %v122
    %124 = vmatmul.f32.gmra.mxu0 %v97
    %v125 = vpop.f32.mrf.mxu0
    %v126 = vadd.f32 0.0, %v125
    %127 = vmatmul.f32.gmra.mxu0 %v100
    %v128 = vpop.f32.mrf.mxu0
    %129 = vmatmul.f32.gmra.mxu0 %v103
    %v130 = vpop.f32.mrf.mxu0
    %131 = vdwg.mxu0
    %132 = vmatpush.msra.mxu0 0.0
    %133 = vmatpush.msra.mxu0 0.0
    %134 = vmatpush.msra.mxu0 0.0
    %135 = vmatpush.msra.mxu0 0.0
    %136 = vmatpush.msra.mxu0 0.0
    %137 = vmatpush.msra.mxu0 0.0
    %138 = vmatpush.msra.mxu0 0.0
    %139 = vmatpush.msra.mxu0 0.0
    %140 = vmatpush.msra.mxu0 0.0
    %141 = vmatpush.msra.mxu0 0.0
    %142 = vmatpush.msra.mxu0 0.0
    %143 = vmatpush.msra.mxu0 0.0
    %144 = vmatpush.msra.mxu0 %v91
    %145 = vmatpush.msra.mxu0 %v89
    %146 = vmatpush.msra.mxu0 %v87
    %147 = vmatpush.msra.mxu0 %v85
    %148 = vmatmul.f32.gmra.mxu0 %v94
    %v149 = vpop.f32.mrf.mxu0
    %150 = vmatmul.f32.gmra.mxu0 %v97
    %v151 = vpop.f32.mrf.mxu0
    %152 = vmatmul.f32.gmra.mxu0 %v100
    %v153 = vpop.f32.mrf.mxu0
    %v154 = vadd.f32 0.0, %v153
    %155 = vmatmul.f32.gmra.mxu0 %v103
    %v156 = vpop.f32.mrf.mxu0
    %v157 = vadd.f32 0.0, %v156
    %158 = vdwg.mxu0
    %v159 = vld [vmem:[#allocation7] sm:$0x1]
    %v160 = vperm.slane %v159, 0
    %v161 = vadd.f32 %v123, %v160
    %v162 = vadd.f32 %v126, %v160
    %v163 = vld [vmem:[#allocation7 + $0x3] sm:$0x1]
    %v164 = vperm.slane %v163, 0
    %v165 = vadd.f32 %v154, %v164
    %v166 = vadd.f32 %v157, %v164
    %169 = vrot.lane.b32.xlu0 %v161, 120
    %v170 = vpop.permute.xlu0 %169
    %171 = vrot.lane.b32.xlu0 %v162, 120
    %v172 = vpop.permute.xlu0 %171
    %173 = vrot.lane.b32.xlu0 %v161, 112
    %v174 = vpop.permute.xlu0 %173
    %175 = vrot.lane.b32.xlu0 %v162, 112
    %v176 = vpop.permute.xlu0 %175
    %177 = vrot.lane.b32.xlu0 %v161, 104
    %v178 = vpop.permute.xlu0 %177
    %179 = vrot.lane.b32.xlu0 %v162, 104
    %v180 = vpop.permute.xlu0 %179
    %181 = vrot.lane.b32.xlu0 %v161, 96
    %v182 = vpop.permute.xlu0 %181
    %vm183 = vcmask 64512
    %v184 = vsel %vm183, %v161, 0
    %v186 = vsel %vm183, %v182, 0
    %188 = vmatpush.xpose.msra.mxu0 0.0
    %189 = vmatpush.xpose.msra.mxu0 0.0
    %190 = vmatpush.xpose.msra.mxu0 0.0
    %191 = vmatpush.xpose.msra.mxu0 0.0
    %192 = vmatpush.xpose.msra.mxu0 0.0
    %193 = vmatpush.xpose.msra.mxu0 0.0
    %194 = vmatpush.xpose.msra.mxu0 0.0
    %195 = vmatpush.xpose.msra.mxu0 0.0
    %196 = vmatpush.xpose.msra.mxu0 0.0
    %197 = vmatpush.xpose.msra.mxu0 0.0
    %198 = vmatpush.xpose.msra.mxu0 0.0
    %199 = vmatpush.xpose.msra.mxu0 0.0
    %200 = vmatpush.xpose.msra.mxu0 0.0
    %201 = vmatpush.xpose.msra.mxu0 0.0
    %202 = vmatpush.xpose.msra.mxu0 0.0
    %203 = vmatpush.xpose.msra.mxu0 %v186
    %204 = vmatmul.f32.gmra.mxu0 %v184
    %v205 = vpop.f32.mrf.mxu0
    %v206 = vadd.f32 0.0, %v205
    %207 = vdwg.mxu0
    %208 = vrot.lane.b32.xlu0 %v170, 96
    %v209 = vpop.permute.xlu0 %208
    %v210 = vsel %vm183, %v170, 0
    %v212 = vsel %vm183, %v209, 0
    %214 = vmatpush.xpose.msra.mxu0 0.0
    %215 = vmatpush.xpose.msra.mxu0 0.0
    %216 = vmatpush.xpose.msra.mxu0 0.0
    %217 = vmatpush.xpose.msra.mxu0 0.0
    %218 = vmatpush.xpose.msra.mxu0 0.0
    %219 = vmatpush.xpose.msra.mxu0 0.0
    %220 = vmatpush.xpose.msra.mxu0 0.0
    %221 = vmatpush.xpose.msra.mxu0 0.0
    %222 = vmatpush.xpose.msra.mxu0 0.0
    %223 = vmatpush.xpose.msra.mxu0 0.0
    %224 = vmatpush.xpose.msra.mxu0 0.0
    %225 = vmatpush.xpose.msra.mxu0 0.0
    %226 = vmatpush.xpose.msra.mxu0 0.0
    %227 = vmatpush.xpose.msra.mxu0 0.0
    %228 = vmatpush.xpose.msra.mxu0 0.0
    %229 = vmatpush.xpose.msra.mxu0 %v212
    %230 = vmatmul.f32.gmra.mxu0 %v210
    %v231 = vpop.f32.mrf.mxu0
    %v232 = vadd.f32 0.0, %v231
    %233 = vdwg.mxu0
    %234 = vrot.lane.b32.xlu0 %v174, 96
    %v235 = vpop.permute.xlu0 %234
    %v236 = vsel %vm183, %v174, 0
    %v238 = vsel %vm183, %v235, 0
    %240 = vmatpush.xpose.msra.mxu0 0.0
    %241 = vmatpush.xpose.msra.mxu0 0.0
    %242 = vmatpush.xpose.msra.mxu0 0.0
    %243 = vmatpush.xpose.msra.mxu0 0.0
    %244 = vmatpush.xpose.msra.mxu0 0.0
    %245 = vmatpush.xpose.msra.mxu0 0.0
    %246 = vmatpush.xpose.msra.mxu0 0.0
    %247 = vmatpush.xpose.msra.mxu0 0.0
    %248 = vmatpush.xpose.msra.mxu0 0.0
    %249 = vmatpush.xpose.msra.mxu0 0.0
    %250 = vmatpush.xpose.msra.mxu0 0.0
    %251 = vmatpush.xpose.msra.mxu0 0.0
    %252 = vmatpush.xpose.msra.mxu0 0.0
    %253 = vmatpush.xpose.msra.mxu0 0.0
    %254 = vmatpush.xpose.msra.mxu0 0.0
    %255 = vmatpush.xpose.msra.mxu0 %v238
    %256 = vmatmul.f32.gmra.mxu0 %v236
    %v257 = vpop.f32.mrf.mxu0
    %v258 = vadd.f32 0.0, %v257
    %259 = vdwg.mxu0
    %260 = vrot.lane.b32.xlu0 %v178, 96
    %v261 = vpop.permute.xlu0 %260
    %v262 = vsel %vm183, %v178, 0
    %v264 = vsel %vm183, %v261, 0
    %266 = vmatpush.xpose.msra.mxu0 0.0
    %267 = vmatpush.xpose.msra.mxu0 0.0
    %268 = vmatpush.xpose.msra.mxu0 0.0
    %269 = vmatpush.xpose.msra.mxu0 0.0
    %270 = vmatpush.xpose.msra.mxu0 0.0
    %271 = vmatpush.xpose.msra.mxu0 0.0
    %272 = vmatpush.xpose.msra.mxu0 0.0
    %273 = vmatpush.xpose.msra.mxu0 0.0
    %274 = vmatpush.xpose.msra.mxu0 0.0
    %275 = vmatpush.xpose.msra.mxu0 0.0
    %276 = vmatpush.xpose.msra.mxu0 0.0
    %277 = vmatpush.xpose.msra.mxu0 0.0
    %278 = vmatpush.xpose.msra.mxu0 0.0
    %279 = vmatpush.xpose.msra.mxu0 0.0
    %280 = vmatpush.xpose.msra.mxu0 0.0
    %281 = vmatpush.xpose.msra.mxu0 %v264
    %282 = vmatmul.f32.gmra.mxu0 %v262
    %v283 = vpop.f32.mrf.mxu0
    %v284 = vadd.f32 0.0, %v283
    %285 = vdwg.mxu0
    %286 = vrot.lane.b32.xlu0 %v162, 96
    %v287 = vpop.permute.xlu0 %286
    %v288 = vsel %vm183, %v162, 0
    %v290 = vsel %vm183, %v287, 0
    %292 = vmatpush.xpose.msra.mxu0 0.0
    %293 = vmatpush.xpose.msra.mxu0 0.0
    %294 = vmatpush.xpose.msra.mxu0 0.0
    %295 = vmatpush.xpose.msra.mxu0 0.0
    %296 = vmatpush.xpose.msra.mxu0 0.0
    %297 = vmatpush.xpose.msra.mxu0 0.0
    %298 = vmatpush.xpose.msra.mxu0 0.0
    %299 = vmatpush.xpose.msra.mxu0 0.0
    %300 = vmatpush.xpose.msra.mxu0 0.0
    %301 = vmatpush.xpose.msra.mxu0 0.0
    %302 = vmatpush.xpose.msra.mxu0 0.0
    %303 = vmatpush.xpose.msra.mxu0 0.0
    %304 = vmatpush.xpose.msra.mxu0 0.0
    %305 = vmatpush.xpose.msra.mxu0 0.0
    %306 = vmatpush.xpose.msra.mxu0 0.0
    %307 = vmatpush.xpose.msra.mxu0 %v290
    %308 = vmatmul.f32.gmra.mxu0 %v288
    %v309 = vpop.f32.mrf.mxu0
    %v310 = vadd.f32 0.0, %v309
    %311 = vdwg.mxu0
    %312 = vrot.lane.b32.xlu0 %v172, 96
    %v313 = vpop.permute.xlu0 %312
    %v314 = vsel %vm183, %v172, 0
    %v316 = vsel %vm183, %v313, 0
    %318 = vmatpush.xpose.msra.mxu0 0.0
    %319 = vmatpush.xpose.msra.mxu0 0.0
    %320 = vmatpush.xpose.msra.mxu0 0.0
    %321 = vmatpush.xpose.msra.mxu0 0.0
    %322 = vmatpush.xpose.msra.mxu0 0.0
    %323 = vmatpush.xpose.msra.mxu0 0.0
    %324 = vmatpush.xpose.msra.mxu0 0.0
    %325 = vmatpush.xpose.msra.mxu0 0.0
    %326 = vmatpush.xpose.msra.mxu0 0.0
    %327 = vmatpush.xpose.msra.mxu0 0.0
    %328 = vmatpush.xpose.msra.mxu0 0.0
    %329 = vmatpush.xpose.msra.mxu0 0.0
    %330 = vmatpush.xpose.msra.mxu0 0.0
    %331 = vmatpush.xpose.msra.mxu0 0.0
    %332 = vmatpush.xpose.msra.mxu0 0.0
    %333 = vmatpush.xpose.msra.mxu0 %v316
    %334 = vmatmul.f32.gmra.mxu0 %v314
    %v335 = vpop.f32.mrf.mxu0
    %v336 = vadd.f32 0.0, %v335
    %337 = vdwg.mxu0
    %338 = vrot.lane.b32.xlu0 %v176, 96
    %v339 = vpop.permute.xlu0 %338
    %v340 = vsel %vm183, %v176, 0
    %v342 = vsel %vm183, %v339, 0
    %344 = vmatpush.xpose.msra.mxu0 0.0
    %345 = vmatpush.xpose.msra.mxu0 0.0
    %346 = vmatpush.xpose.msra.mxu0 0.0
    %347 = vmatpush.xpose.msra.mxu0 0.0
    %348 = vmatpush.xpose.msra.mxu0 0.0
    %349 = vmatpush.xpose.msra.mxu0 0.0
    %350 = vmatpush.xpose.msra.mxu0 0.0
    %351 = vmatpush.xpose.msra.mxu0 0.0
    %352 = vmatpush.xpose.msra.mxu0 0.0
    %353 = vmatpush.xpose.msra.mxu0 0.0
    %354 = vmatpush.xpose.msra.mxu0 0.0
    %355 = vmatpush.xpose.msra.mxu0 0.0
    %356 = vmatpush.xpose.msra.mxu0 0.0
    %357 = vmatpush.xpose.msra.mxu0 0.0
    %358 = vmatpush.xpose.msra.mxu0 0.0
    %359 = vmatpush.xpose.msra.mxu0 %v342
    %360 = vmatmul.f32.gmra.mxu0 %v340
    %v361 = vpop.f32.mrf.mxu0
    %v362 = vadd.f32 0.0, %v361
    %363 = vdwg.mxu0
    %364 = vrot.lane.b32.xlu0 %v180, 96
    %v365 = vpop.permute.xlu0 %364
    %v366 = vsel %vm183, %v180, 0
    %v368 = vsel %vm183, %v365, 0
    %370 = vmatpush.xpose.msra.mxu0 0.0
    %371 = vmatpush.xpose.msra.mxu0 0.0
    %372 = vmatpush.xpose.msra.mxu0 0.0
    %373 = vmatpush.xpose.msra.mxu0 0.0
    %374 = vmatpush.xpose.msra.mxu0 0.0
    %375 = vmatpush.xpose.msra.mxu0 0.0
    %376 = vmatpush.xpose.msra.mxu0 0.0
    %377 = vmatpush.xpose.msra.mxu0 0.0
    %378 = vmatpush.xpose.msra.mxu0 0.0
    %379 = vmatpush.xpose.msra.mxu0 0.0
    %380 = vmatpush.xpose.msra.mxu0 0.0
    %381 = vmatpush.xpose.msra.mxu0 0.0
    %382 = vmatpush.xpose.msra.mxu0 0.0
    %383 = vmatpush.xpose.msra.mxu0 0.0
    %384 = vmatpush.xpose.msra.mxu0 0.0
    %385 = vmatpush.xpose.msra.mxu0 %v368
    %386 = vmatmul.f32.gmra.mxu0 %v366
    %v387 = vpop.f32.mrf.mxu0
    %v388 = vadd.f32 0.0, %v387
    %389 = vdwg.mxu0
    %v390 = vmul.f32 %v206, 0.35355338
    %v391 = vmul.f32 %v232, 0.35355338
    %v392 = vmul.f32 %v258, 0.35355338
    %v393 = vmul.f32 %v284, 0.35355338
    %v394 = vmul.f32 %v310, 0.35355338
    %v395 = vmul.f32 %v336, 0.35355338
    %v396 = vmul.f32 %v362, 0.35355338
    %v397 = vmul.f32 %v388, 0.35355338
    %v398 = vsel %vm183, %v390, -inf
    %399 = vmax.xlane.f32.xlu0 %v398
    %v400 = vpop.xlane.xlu0 %399
    %v401 = vsel %vm183, %v391, -inf
    %402 = vmax.xlane.f32.xlu0 %v401
    %v403 = vpop.xlane.xlu0 %402
    %v404 = vsel %vm183, %v392, -inf
    %405 = vmax.xlane.f32.xlu0 %v404
    %v406 = vpop.xlane.xlu0 %405
    %v407 = vsel %vm183, %v393, -inf
    %408 = vmax.xlane.f32.xlu0 %v407
    %v409 = vpop.xlane.xlu0 %408
    %v410 = vsel %vm183, %v394, -inf
    %411 = vmax.xlane.f32.xlu0 %v410
    %v412 = vpop.xlane.xlu0 %411
    %v413 = vsel %vm183, %v395, -inf
    %414 = vmax.xlane.f32.xlu0 %v413
    %v415 = vpop.xlane.xlu0 %414
    %v416 = vsel %vm183, %v396, -inf
    %417 = vmax.xlane.f32.xlu0 %v416
    %v418 = vpop.xlane.xlu0 %417
    %v419 = vsel %vm183, %v397, -inf
    %420 = vmax.xlane.f32.xlu0 %v419
    %v421 = vpop.xlane.xlu0 %420
    %v422 = vsub.f32 %v390, %v400
    %v423 = vsub.f32 %v391, %v403
    %v424 = vsub.f32 %v392, %v406
    %v425 = vsub.f32 %v393, %v409
    %v426 = vsub.f32 %v394, %v412
    %v427 = vsub.f32 %v395, %v415
    %v428 = vsub.f32 %v396, %v418
    %v429 = vsub.f32 %v397, %v421
    %v430 = vmul.f32 %v422, 1.442695
    %v431 = vpow.pop %v430
    %v432 = vmul.f32 %v423, 1.442695
    %v433 = vpow.pop %v432
    %v434 = vmul.f32 %v424, 1.442695
    %v435 = vpow.pop %v434
    %v436 = vmul.f32 %v425, 1.442695
    %v437 = vpow.pop %v436
    %v438 = vmul.f32 %v426, 1.442695
    %v439 = vpow.pop %v438
    %v440 = vmul.f32 %v427, 1.442695
    %v441 = vpow.pop %v440
    %v442 = vmul.f32 %v428, 1.442695
    %v443 = vpow.pop %v442
    %v444 = vmul.f32 %v429, 1.442695
    %v445 = vpow.pop %v444
    %v446 = vsel %vm183, %v431, 0.0
    %447 = vadd.xlane.f32.xlu0 %v446
    %v448 = vpop.xlane.xlu0 %447
    %v449 = vsel %vm183, %v433, 0.0
    %450 = vadd.xlane.f32.xlu0 %v449
    %v451 = vpop.xlane.xlu0 %450
    %v452 = vsel %vm183, %v435, 0.0
    %453 = vadd.xlane.f32.xlu0 %v452
    %v454 = vpop.xlane.xlu0 %453
    %v455 = vsel %vm183, %v437, 0.0
    %456 = vadd.xlane.f32.xlu0 %v455
    %v457 = vpop.xlane.xlu0 %456
    %v458 = vsel %vm183, %v439, 0.0
    %459 = vadd.xlane.f32.xlu0 %v458
    %v460 = vpop.xlane.xlu0 %459
    %v461 = vsel %vm183, %v441, 0.0
    %462 = vadd.xlane.f32.xlu0 %v461
    %v463 = vpop.xlane.xlu0 %462
    %v464 = vsel %vm183, %v443, 0.0
    %465 = vadd.xlane.f32.xlu0 %v464
    %v466 = vpop.xlane.xlu0 %465
    %v467 = vsel %vm183, %v445, 0.0
    %468 = vadd.xlane.f32.xlu0 %v467
    %v469 = vpop.xlane.xlu0 %468
    %v470 = vrcp.pop %v448
    %v471 = vrcp.pop %v451
    %v472 = vrcp.pop %v454
    %v473 = vrcp.pop %v457
    %v474 = vrcp.pop %v460
    %v475 = vrcp.pop %v463
    %v476 = vrcp.pop %v466
    %v477 = vrcp.pop %v469
    %v478 = vmul.f32 %v431, %v470
    %v479 = vmul.f32 %v433, %v471
    %v480 = vmul.f32 %v435, %v472
    %v481 = vmul.f32 %v437, %v473
    %v482 = vmul.f32 %v439, %v474
    %v483 = vmul.f32 %v441, %v475
    %v484 = vmul.f32 %v443, %v476
    %v485 = vmul.f32 %v445, %v477
    %486 = vrot.lane.b32.xlu0 %v161, 64
    %v487 = vpop.permute.xlu0 %486
    %v490 = vsel %vm183, %v478, 0
    %492 = vmatpush.msra.mxu0 0.0
    %493 = vmatpush.msra.mxu0 0.0
    %494 = vmatpush.msra.mxu0 0.0
    %495 = vmatpush.msra.mxu0 0.0
    %496 = vmatpush.msra.mxu0 0.0
    %497 = vmatpush.msra.mxu0 0.0
    %498 = vmatpush.msra.mxu0 0.0
    %499 = vmatpush.msra.mxu0 0.0
    %500 = vmatpush.msra.mxu0 0.0
    %501 = vmatpush.msra.mxu0 0.0
    %502 = vmatpush.msra.mxu0 0.0
    %503 = vmatpush.msra.mxu0 0.0
    %504 = vmatpush.msra.mxu0 0.0
    %505 = vmatpush.msra.mxu0 0.0
    %506 = vmatpush.msra.mxu0 0.0
    %507 = vmatpush.msra.mxu0 %v487
    %508 = vmatmul.f32.gmra.mxu0 %v490
    %v509 = vpop.f32.mrf.mxu0
    %v510 = vadd.f32 0.0, %v509
    %511 = vdwg.mxu0
    %512 = vrot.lane.b32.xlu0 %v170, 64
    %v513 = vpop.permute.xlu0 %512
    %v516 = vsel %vm183, %v479, 0
    %518 = vmatpush.msra.mxu0 0.0
    %519 = vmatpush.msra.mxu0 0.0
    %520 = vmatpush.msra.mxu0 0.0
    %521 = vmatpush.msra.mxu0 0.0
    %522 = vmatpush.msra.mxu0 0.0
    %523 = vmatpush.msra.mxu0 0.0
    %524 = vmatpush.msra.mxu0 0.0
    %525 = vmatpush.msra.mxu0 0.0
    %526 = vmatpush.msra.mxu0 0.0
    %527 = vmatpush.msra.mxu0 0.0
    %528 = vmatpush.msra.mxu0 0.0
    %529 = vmatpush.msra.mxu0 0.0
    %530 = vmatpush.msra.mxu0 0.0
    %531 = vmatpush.msra.mxu0 0.0
    %532 = vmatpush.msra.mxu0 0.0
    %533 = vmatpush.msra.mxu0 %v513
    %534 = vmatmul.f32.gmra.mxu0 %v516
    %v535 = vpop.f32.mrf.mxu0
    %v536 = vadd.f32 0.0, %v535
    %537 = vdwg.mxu0
    %538 = vrot.lane.b32.xlu0 %v174, 64
    %v539 = vpop.permute.xlu0 %538
    %v542 = vsel %vm183, %v480, 0
    %544 = vmatpush.msra.mxu0 0.0
    %545 = vmatpush.msra.mxu0 0.0
    %546 = vmatpush.msra.mxu0 0.0
    %547 = vmatpush.msra.mxu0 0.0
    %548 = vmatpush.msra.mxu0 0.0
    %549 = vmatpush.msra.mxu0 0.0
    %550 = vmatpush.msra.mxu0 0.0
    %551 = vmatpush.msra.mxu0 0.0
    %552 = vmatpush.msra.mxu0 0.0
    %553 = vmatpush.msra.mxu0 0.0
    %554 = vmatpush.msra.mxu0 0.0
    %555 = vmatpush.msra.mxu0 0.0
    %556 = vmatpush.msra.mxu0 0.0
    %557 = vmatpush.msra.mxu0 0.0
    %558 = vmatpush.msra.mxu0 0.0
    %559 = vmatpush.msra.mxu0 %v539
    %560 = vmatmul.f32.gmra.mxu0 %v542
    %v561 = vpop.f32.mrf.mxu0
    %v562 = vadd.f32 0.0, %v561
    %563 = vdwg.mxu0
    %564 = vrot.lane.b32.xlu0 %v178, 64
    %v565 = vpop.permute.xlu0 %564
    %v568 = vsel %vm183, %v481, 0
    %570 = vmatpush.msra.mxu0 0.0
    %571 = vmatpush.msra.mxu0 0.0
    %572 = vmatpush.msra.mxu0 0.0
    %573 = vmatpush.msra.mxu0 0.0
    %574 = vmatpush.msra.mxu0 0.0
    %575 = vmatpush.msra.mxu0 0.0
    %576 = vmatpush.msra.mxu0 0.0
    %577 = vmatpush.msra.mxu0 0.0
    %578 = vmatpush.msra.mxu0 0.0
    %579 = vmatpush.msra.mxu0 0.0
    %580 = vmatpush.msra.mxu0 0.0
    %581 = vmatpush.msra.mxu0 0.0
    %582 = vmatpush.msra.mxu0 0.0
    %583 = vmatpush.msra.mxu0 0.0
    %584 = vmatpush.msra.mxu0 0.0
    %585 = vmatpush.msra.mxu0 %v565
    %586 = vmatmul.f32.gmra.mxu0 %v568
    %v587 = vpop.f32.mrf.mxu0
    %v588 = vadd.f32 0.0, %v587
    %589 = vdwg.mxu0
    %590 = vrot.lane.b32.xlu0 %v162, 64
    %v591 = vpop.permute.xlu0 %590
    %v594 = vsel %vm183, %v482, 0
    %596 = vmatpush.msra.mxu0 0.0
    %597 = vmatpush.msra.mxu0 0.0
    %598 = vmatpush.msra.mxu0 0.0
    %599 = vmatpush.msra.mxu0 0.0
    %600 = vmatpush.msra.mxu0 0.0
    %601 = vmatpush.msra.mxu0 0.0
    %602 = vmatpush.msra.mxu0 0.0
    %603 = vmatpush.msra.mxu0 0.0
    %604 = vmatpush.msra.mxu0 0.0
    %605 = vmatpush.msra.mxu0 0.0
    %606 = vmatpush.msra.mxu0 0.0
    %607 = vmatpush.msra.mxu0 0.0
    %608 = vmatpush.msra.mxu0 0.0
    %609 = vmatpush.msra.mxu0 0.0
    %610 = vmatpush.msra.mxu0 0.0
    %611 = vmatpush.msra.mxu0 %v591
    %612 = vmatmul.f32.gmra.mxu0 %v594
    %v613 = vpop.f32.mrf.mxu0
    %v614 = vadd.f32 0.0, %v613
    %615 = vdwg.mxu0
    %616 = vrot.lane.b32.xlu0 %v172, 64
    %v617 = vpop.permute.xlu0 %616
    %v620 = vsel %vm183, %v483, 0
    %622 = vmatpush.msra.mxu0 0.0
    %623 = vmatpush.msra.mxu0 0.0
    %624 = vmatpush.msra.mxu0 0.0
    %625 = vmatpush.msra.mxu0 0.0
    %626 = vmatpush.msra.mxu0 0.0
    %627 = vmatpush.msra.mxu0 0.0
    %628 = vmatpush.msra.mxu0 0.0
    %629 = vmatpush.msra.mxu0 0.0
    %630 = vmatpush.msra.mxu0 0.0
    %631 = vmatpush.msra.mxu0 0.0
    %632 = vmatpush.msra.mxu0 0.0
    %633 = vmatpush.msra.mxu0 0.0
    %634 = vmatpush.msra.mxu0 0.0
    %635 = vmatpush.msra.mxu0 0.0
    %636 = vmatpush.msra.mxu0 0.0
    %637 = vmatpush.msra.mxu0 %v617
    %638 = vmatmul.f32.gmra.mxu0 %v620
    %v639 = vpop.f32.mrf.mxu0
    %v640 = vadd.f32 0.0, %v639
    %641 = vdwg.mxu0
    %642 = vrot.lane.b32.xlu0 %v176, 64
    %v643 = vpop.permute.xlu0 %642
    %v646 = vsel %vm183, %v484, 0
    %648 = vmatpush.msra.mxu0 0.0
    %649 = vmatpush.msra.mxu0 0.0
    %650 = vmatpush.msra.mxu0 0.0
    %651 = vmatpush.msra.mxu0 0.0
    %652 = vmatpush.msra.mxu0 0.0
    %653 = vmatpush.msra.mxu0 0.0
    %654 = vmatpush.msra.mxu0 0.0
    %655 = vmatpush.msra.mxu0 0.0
    %656 = vmatpush.msra.mxu0 0.0
    %657 = vmatpush.msra.mxu0 0.0
    %658 = vmatpush.msra.mxu0 0.0
    %659 = vmatpush.msra.mxu0 0.0
    %660 = vmatpush.msra.mxu0 0.0
    %661 = vmatpush.msra.mxu0 0.0
    %662 = vmatpush.msra.mxu0 0.0
    %663 = vmatpush.msra.mxu0 %v643
    %664 = vmatmul.f32.gmra.mxu0 %v646
    %v665 = vpop.f32.mrf.mxu0
    %v666 = vadd.f32 0.0, %v665
    %667 = vdwg.mxu0
    %668 = vrot.lane.b32.xlu0 %v180, 64
    %v669 = vpop.permute.xlu0 %668
    %v672 = vsel %vm183, %v485, 0
    %674 = vmatpush.msra.mxu0 0.0
    %675 = vmatpush.msra.mxu0 0.0
    %676 = vmatpush.msra.mxu0 0.0
    %677 = vmatpush.msra.mxu0 0.0
    %678 = vmatpush.msra.mxu0 0.0
    %679 = vmatpush.msra.mxu0 0.0
    %680 = vmatpush.msra.mxu0 0.0
    %681 = vmatpush.msra.mxu0 0.0
    %682 = vmatpush.msra.mxu0 0.0
    %683 = vmatpush.msra.mxu0 0.0
    %684 = vmatpush.msra.mxu0 0.0
    %685 = vmatpush.msra.mxu0 0.0
    %686 = vmatpush.msra.mxu0 0.0
    %687 = vmatpush.msra.mxu0 0.0
    %688 = vmatpush.msra.mxu0 0.0
    %689 = vmatpush.msra.mxu0 %v669
    %690 = vmatmul.f32.gmra.mxu0 %v672
    %v691 = vpop.f32.mrf.mxu0
    %v692 = vadd.f32 0.0, %v691
    %693 = vdwg.mxu0
    %696 = vrot.lane.b32.xlu0 %v536, 8
    %v697 = vpop.permute.xlu0 %696
    %698 = vrot.lane.b32.xlu0 %v640, 8
    %v699 = vpop.permute.xlu0 %698
    %704 = vrot.lane.b32.xlu0 %v562, 16
    %v705 = vpop.permute.xlu0 %704
    %706 = vrot.lane.b32.xlu0 %v666, 16
    %v707 = vpop.permute.xlu0 %706
    %712 = vrot.lane.b32.xlu0 %v588, 24
    %v713 = vpop.permute.xlu0 %712
    %714 = vrot.lane.b32.xlu0 %v692, 24
    %v715 = vpop.permute.xlu0 %714
    %v718 = vsel %vm183, %v510, %v697
    %v719 = vsel %vm183, %v614, %v699
    %vm720 = vcmask 130048
    %v721 = vsel %vm720, %v718, %v705
    %v722 = vsel %vm720, %v719, %v707
    %vm723 = vcmask 195584
    %v724 = vsel %vm723, %v721, %v713
    %v725 = vsel %vm723, %v722, %v715
    %v726 = vld [vmem:[#allocation6 + $0x10] sm:$0xff]
    %v727 = vld [vmem:[#allocation6 + $0x48] sm:$0xff]
    %v728 = vld [vmem:[#allocation6 + $0x80] sm:$0xff]
    %v729 = vld [vmem:[#allocation6 + $0xb8] sm:$0xff]
    %v730 = vld [vmem:[#allocation7 + $0x1] sm:$0x1]
    %v731 = vperm.slane %v730, 0
    %v733 = vsel %vm92, %v724, 0
    %v736 = vsel %vm92, %v725, 0
    %738 = vmatpush.msra.mxu0 0.0
    %739 = vmatpush.msra.mxu0 0.0
    %740 = vmatpush.msra.mxu0 0.0
    %741 = vmatpush.msra.mxu0 0.0
    %742 = vmatpush.msra.mxu0 0.0
    %743 = vmatpush.msra.mxu0 0.0
    %744 = vmatpush.msra.mxu0 0.0
    %745 = vmatpush.msra.mxu0 0.0
    %746 = vmatpush.msra.mxu0 0.0
    %747 = vmatpush.msra.mxu0 0.0
    %748 = vmatpush.msra.mxu0 0.0
    %749 = vmatpush.msra.mxu0 0.0
    %750 = vmatpush.msra.mxu0 %v729
    %751 = vmatpush.msra.mxu0 %v728
    %752 = vmatpush.msra.mxu0 %v727
    %753 = vmatpush.msra.mxu0 %v726
    %754 = vmatmul.f32.gmra.mxu0 %v733
    %v755 = vpop.f32.mrf.mxu0
    %v756 = vadd.f32 %v731, %v755
    %757 = vmatmul.f32.gmra.mxu0 %v736
    %v758 = vpop.f32.mrf.mxu0
    %v759 = vadd.f32 %v731, %v758
    %760 = vdwg.mxu0
    %v761 = vadd.f32 %v80, %v756
    %v762 = vadd.f32 %v81, %v759
    %v763 = vld [vmem:[#allocation7 + $0x7] sm:$0x1]
    %v764 = vld [vmem:[#allocation7 + $0x8] sm:$0x1]
    %v765 = vsel %vm92, %v761, 0.0
    %766 = vadd.xlane.f32.xlu0 %v765
    %v767 = vpop.xlane.xlu0 %766
    %v768 = vsel %vm92, %v762, 0.0
    %769 = vadd.xlane.f32.xlu0 %v768
    %v770 = vpop.xlane.xlu0 %769
    %v771 = vrcp.pop 32.0
    %v772 = vmul.f32 32.0, %v771
    %v773 = vsub.f32 1.0, %v772
    %v774 = vmul.f32 %v771, %v773
    %v775 = vadd.f32 %v771, %v774
    %vm776 = vweird.f32 %v771
    %v777 = vsel %vm776, %v771, %v775
    %v778 = vmul.f32 %v767, %v777
    %v779 = vmul.f32 %v770, %v777
    %v780 = vsub.f32 %v761, %v778
    %v781 = vsub.f32 %v762, %v779
    %v782 = vmul.f32 %v780, %v780
    %v783 = vmul.f32 %v781, %v781
    %v784 = vsel %vm92, %v782, 0.0
    %785 = vadd.xlane.f32.xlu0 %v784
    %v786 = vpop.xlane.xlu0 %785
    %v787 = vsel %vm92, %v783, 0.0
    %788 = vadd.xlane.f32.xlu0 %v787
    %v789 = vpop.xlane.xlu0 %788
    %v790 = vmul.f32 %v786, %v777
    %v791 = vmul.f32 %v789, %v777
    %v792 = vadd.f32 %v790, 1e-05
    %v793 = vadd.f32 %v791, 1e-05
    %v794 = vrsqrt.pop %v792
    %v795 = vmul.f32 %v794, %v792
    %v796 = vmul.f32 %v795, %v794
    %v797 = vmul.f32 0.5, %v796
    %v798 = vsub.f32 1.5, %v797
    %v799 = vmul.f32 %v794, %v798
    %vm800 = vweird.f32 %v792
    %vm801 = vweird.f32 %v794
    %vm802 = vmor %vm800, %vm801
    %v803 = vsel %vm802, %v794, %v799
    %v804 = vrsqrt.pop %v793
    %v805 = vmul.f32 %v804, %v793
    %v806 = vmul.f32 %v805, %v804
    %v807 = vmul.f32 0.5, %v806
    %v808 = vsub.f32 1.5, %v807
    %v809 = vmul.f32 %v804, %v808
    %vm810 = vweird.f32 %v793
    %vm811 = vweird.f32 %v804
    %vm812 = vmor %vm810, %vm811
    %v813 = vsel %vm812, %v804, %v809
    %v814 = vmul.f32 %v780, %v803
    %v815 = vmul.f32 %v781, %v813
    %v816 = vperm.slane %v763, 0
    %v817 = vmul.f32 %v814, %v816
    %v818 = vmul.f32 %v815, %v816
    %v819 = vperm.slane %v764, 0
    %v820 = vadd.f32 %v817, %v819
    %v821 = vadd.f32 %v818, %v819
    %v822 = vld [vmem:[#allocation6 + $0x18] sm:$0xff]
    %v823 = vld [vmem:[#allocation6 + $0x50] sm:$0xff]
    %v824 = vld [vmem:[#allocation6 + $0x88] sm:$0xff]
    %v825 = vld [vmem:[#allocation6 + $0xc0] sm:$0xff]
    %v826 = vld [vmem:[#allocation7 + $0x2] sm:$0x1]
    %v827 = vperm.slane %v826, 0
    %v829 = vsel %vm92, %v820, 0
    %v832 = vsel %vm92, %v821, 0
    %834 = vmatpush.msra.mxu0 0.0
    %835 = vmatpush.msra.mxu0 0.0
    %836 = vmatpush.msra.mxu0 0.0
    %837 = vmatpush.msra.mxu0 0.0
    %838 = vmatpush.msra.mxu0 0.0
    %839 = vmatpush.msra.mxu0 0.0
    %840 = vmatpush.msra.mxu0 0.0
    %841 = vmatpush.msra.mxu0 0.0
    %842 = vmatpush.msra.mxu0 0.0
    %843 = vmatpush.msra.mxu0 0.0
    %844 = vmatpush.msra.mxu0 0.0
    %845 = vmatpush.msra.mxu0 0.0
    %846 = vmatpush.msra.mxu0 %v825
    %847 = vmatpush.msra.mxu0 %v824
    %848 = vmatpush.msra.mxu0 %v823
    %849 = vmatpush.msra.mxu0 %v822
    %850 = vmatmul.f32.gmra.mxu0 %v829
    %v851 = vpop.f32.mrf.mxu0
    %v852 = vadd.f32 %v827, %v851
    %853 = vmatmul.f32.gmra.mxu0 %v832
    %v854 = vpop.f32.mrf.mxu0
    %v855 = vadd.f32 %v827, %v854
    %856 = vdwg.mxu0
    %859 = vrot.lane.b32.xlu0 %v852, 120
    %v860 = vpop.permute.xlu0 %859
    %861 = vrot.lane.b32.xlu0 %v855, 120
    %v862 = vpop.permute.xlu0 %861
    %863 = vrot.lane.b32.xlu0 %v852, 112
    %v864 = vpop.permute.xlu0 %863
    %865 = vrot.lane.b32.xlu0 %v855, 112
    %v866 = vpop.permute.xlu0 %865
    %867 = vrot.lane.b32.xlu0 %v852, 104
    %v868 = vpop.permute.xlu0 %867
    %869 = vrot.lane.b32.xlu0 %v855, 104
    %v870 = vpop.permute.xlu0 %869
    %873 = vrot.lane.b32.xlu0 %v165, 120
    %v874 = vpop.permute.xlu0 %873
    %875 = vrot.lane.b32.xlu0 %v166, 120
    %v876 = vpop.permute.xlu0 %875
    %877 = vrot.lane.b32.xlu0 %v165, 112
    %v878 = vpop.permute.xlu0 %877
    %879 = vrot.lane.b32.xlu0 %v166, 112
    %v880 = vpop.permute.xlu0 %879
    %881 = vrot.lane.b32.xlu0 %v165, 104
    %v882 = vpop.permute.xlu0 %881
    %883 = vrot.lane.b32.xlu0 %v166, 104
    %v884 = vpop.permute.xlu0 %883
    %v885 = vsel %vm183, %v852, 0
    %v887 = vsel %vm183, %v165, 0
    %889 = vmatpush.xpose.msra.mxu0 0.0
    %890 = vmatpush.xpose.msra.mxu0 0.0
    %891 = vmatpush.xpose.msra.mxu0 0.0
    %892 = vmatpush.xpose.msra.mxu0 0.0
    %893 = vmatpush.xpose.msra.mxu0 0.0
    %894 = vmatpush.xpose.msra.mxu0 0.0
    %895 = vmatpush.xpose.msra.mxu0 0.0
    %896 = vmatpush.xpose.msra.mxu0 0.0
    %897 = vmatpush.xpose.msra.mxu0 0.0
    %898 = vmatpush.xpose.msra.mxu0 0.0
    %899 = vmatpush.xpose.msra.mxu0 0.0
    %900 = vmatpush.xpose.msra.mxu0 0.0
    %901 = vmatpush.xpose.msra.mxu0 0.0
    %902 = vmatpush.xpose.msra.mxu0 0.0
    %903 = vmatpush.xpose.msra.mxu0 0.0
    %904 = vmatpush.xpose.msra.mxu0 %v887
    %905 = vmatmul.f32.gmra.mxu0 %v885
    %v906 = vpop.f32.mrf.mxu0
    %v907 = vadd.f32 0.0, %v906
    %908 = vdwg.mxu0
    %v909 = vsel %vm183, %v860, 0
    %v911 = vsel %vm183, %v874, 0
    %913 = vmatpush.xpose.msra.mxu0 0.0
    %914 = vmatpush.xpose.msra.mxu0 0.0
    %915 = vmatpush.xpose.msra.mxu0 0.0
    %916 = vmatpush.xpose.msra.mxu0 0.0
    %917 = vmatpush.xpose.msra.mxu0 0.0
    %918 = vmatpush.xpose.msra.mxu0 0.0
    %919 = vmatpush.xpose.msra.mxu0 0.0
    %920 = vmatpush.xpose.msra.mxu0 0.0
    %921 = vmatpush.xpose.msra.mxu0 0.0
    %922 = vmatpush.xpose.msra.mxu0 0.0
    %923 = vmatpush.xpose.msra.mxu0 0.0
    %924 = vmatpush.xpose.msra.mxu0 0.0
    %925 = vmatpush.xpose.msra.mxu0 0.0
    %926 = vmatpush.xpose.msra.mxu0 0.0
    %927 = vmatpush.xpose.msra.mxu0 0.0
    %928 = vmatpush.xpose.msra.mxu0 %v911
    %929 = vmatmul.f32.gmra.mxu0 %v909
    %v930 = vpop.f32.mrf.mxu0
    %v931 = vadd.f32 0.0, %v930
    %932 = vdwg.mxu0
    %v933 = vsel %vm183, %v864, 0
    %v935 = vsel %vm183, %v878, 0
    %937 = vmatpush.xpose.msra.mxu0 0.0
    %938 = vmatpush.xpose.msra.mxu0 0.0
    %939 = vmatpush.xpose.msra.mxu0 0.0
    %940 = vmatpush.xpose.msra.mxu0 0.0
    %941 = vmatpush.xpose.msra.mxu0 0.0
    %942 = vmatpush.xpose.msra.mxu0 0.0
    %943 = vmatpush.xpose.msra.mxu0 0.0
    %944 = vmatpush.xpose.msra.mxu0 0.0
    %945 = vmatpush.xpose.msra.mxu0 0.0
    %946 = vmatpush.xpose.msra.mxu0 0.0
    %947 = vmatpush.xpose.msra.mxu0 0.0
    %948 = vmatpush.xpose.msra.mxu0 0.0
    %949 = vmatpush.xpose.msra.mxu0 0.0
    %950 = vmatpush.xpose.msra.mxu0 0.0
    %951 = vmatpush.xpose.msra.mxu0 0.0
    %952 = vmatpush.xpose.msra.mxu0 %v935
    %953 = vmatmul.f32.gmra.mxu0 %v933
    %v954 = vpop.f32.mrf.mxu0
    %v955 = vadd.f32 0.0, %v954
    %956 = vdwg.mxu0
    %v957 = vsel %vm183, %v868, 0
    %v959 = vsel %vm183, %v882, 0
    %961 = vmatpush.xpose.msra.mxu0 0.0
    %962 = vmatpush.xpose.msra.mxu0 0.0
    %963 = vmatpush.xpose.msra.mxu0 0.0
    %964 = vmatpush.xpose.msra.mxu0 0.0
    %965 = vmatpush.xpose.msra.mxu0 0.0
    %966 = vmatpush.xpose.msra.mxu0 0.0
    %967 = vmatpush.xpose.msra.mxu0 0.0
    %968 = vmatpush.xpose.msra.mxu0 0.0
    %969 = vmatpush.xpose.msra.mxu0 0.0
    %970 = vmatpush.xpose.msra.mxu0 0.0
    %971 = vmatpush.xpose.msra.mxu0 0.0
    %972 = vmatpush.xpose.msra.mxu0 0.0
    %973 = vmatpush.xpose.msra.mxu0 0.0
    %974 = vmatpush.xpose.msra.mxu0 0.0
    %975 = vmatpush.xpose.msra.mxu0 0.0
    %976 = vmatpush.xpose.msra.mxu0 %v959
    %977 = vmatmul.f32.gmra.mxu0 %v957
    %v978 = vpop.f32.mrf.mxu0
    %v979 = vadd.f32 0.0, %v978
    %980 = vdwg.mxu0
    %v981 = vsel %vm183, %v855, 0
    %v983 = vsel %vm183, %v166, 0
    %985 = vmatpush.xpose.msra.mxu0 0.0
    %986 = vmatpush.xpose.msra.mxu0 0.0
    %987 = vmatpush.xpose.msra.mxu0 0.0
    %988 = vmatpush.xpose.msra.mxu0 0.0
    %989 = vmatpush.xpose.msra.mxu0 0.0
    %990 = vmatpush.xpose.msra.mxu0 0.0
    %991 = vmatpush.xpose.msra.mxu0 0.0
    %992 = vmatpush.xpose.msra.mxu0 0.0
    %993 = vmatpush.xpose.msra.mxu0 0.0
    %994 = vmatpush.xpose.msra.mxu0 0.0
    %995 = vmatpush.xpose.msra.mxu0 0.0
    %996 = vmatpush.xpose.msra.mxu0 0.0
    %997 = vmatpush.xpose.msra.mxu0 0.0
    %998 = vmatpush.xpose.msra.mxu0 0.0
    %999 = vmatpush.xpose.msra.mxu0 0.0
    %1000 = vmatpush.xpose.msra.mxu0 %v983
    %1001 = vmatmul.f32.gmra.mxu0 %v981
    %v1002 = vpop.f32.mrf.mxu0
    %v1003 = vadd.f32 0.0, %v1002
    %1004 = vdwg.mxu0
    %v1005 = vsel %vm183, %v862, 0
    %v1007 = vsel %vm183, %v876, 0
    %1009 = vmatpush.xpose.msra.mxu0 0.0
    %1010 = vmatpush.xpose.msra.mxu0 0.0
    %1011 = vmatpush.xpose.msra.mxu0 0.0
    %1012 = vmatpush.xpose.msra.mxu0 0.0
    %1013 = vmatpush.xpose.msra.mxu0 0.0
    %1014 = vmatpush.xpose.msra.mxu0 0.0
    %1015 = vmatpush.xpose.msra.mxu0 0.0
    %1016 = vmatpush.xpose.msra.mxu0 0.0
    %1017 = vmatpush.xpose.msra.mxu0 0.0
    %1018 = vmatpush.xpose.msra.mxu0 0.0
    %1019 = vmatpush.xpose.msra.mxu0 0.0
    %1020 = vmatpush.xpose.msra.mxu0 0.0
    %1021 = vmatpush.xpose.msra.mxu0 0.0
    %1022 = vmatpush.xpose.msra.mxu0 0.0
    %1023 = vmatpush.xpose.msra.mxu0 0.0
    %1024 = vmatpush.xpose.msra.mxu0 %v1007
    %1025 = vmatmul.f32.gmra.mxu0 %v1005
    %v1026 = vpop.f32.mrf.mxu0
    %v1027 = vadd.f32 0.0, %v1026
    %1028 = vdwg.mxu0
    %v1029 = vsel %vm183, %v866, 0
    %v1031 = vsel %vm183, %v880, 0
    %1033 = vmatpush.xpose.msra.mxu0 0.0
    %1034 = vmatpush.xpose.msra.mxu0 0.0
    %1035 = vmatpush.xpose.msra.mxu0 0.0
    %1036 = vmatpush.xpose.msra.mxu0 0.0
    %1037 = vmatpush.xpose.msra.mxu0 0.0
    %1038 = vmatpush.xpose.msra.mxu0 0.0
    %1039 = vmatpush.xpose.msra.mxu0 0.0
    %1040 = vmatpush.xpose.msra.mxu0 0.0
    %1041 = vmatpush.xpose.msra.mxu0 0.0
    %1042 = vmatpush.xpose.msra.mxu0 0.0
    %1043 = vmatpush.xpose.msra.mxu0 0.0
    %1044 = vmatpush.xpose.msra.mxu0 0.0
    %1045 = vmatpush.xpose.msra.mxu0 0.0
    %1046 = vmatpush.xpose.msra.mxu0 0.0
    %1047 = vmatpush.xpose.msra.mxu0 0.0
    %1048 = vmatpush.xpose.msra.mxu0 %v1031
    %1049 = vmatmul.f32.gmra.mxu0 %v1029
    %v1050 = vpop.f32.mrf.mxu0
    %v1051 = vadd.f32 0.0, %v1050
    %1052 = vdwg.mxu0
    %v1053 = vsel %vm183, %v870, 0
    %v1055 = vsel %vm183, %v884, 0
    %1057 = vmatpush.xpose.msra.mxu0 0.0
    %1058 = vmatpush.xpose.msra.mxu0 0.0
    %1059 = vmatpush.xpose.msra.mxu0 0.0
    %1060 = vmatpush.xpose.msra.mxu0 0.0
    %1061 = vmatpush.xpose.msra.mxu0 0.0
    %1062 = vmatpush.xpose.msra.mxu0 0.0
    %1063 = vmatpush.xpose.msra.mxu0 0.0
    %1064 = vmatpush.xpose.msra.mxu0 0.0
    %1065 = vmatpush.xpose.msra.mxu0 0.0
    %1066 = vmatpush.xpose.msra.mxu0 0.0
    %1067 = vmatpush.xpose.msra.mxu0 0.0
    %1068 = vmatpush.xpose.msra.mxu0 0.0
    %1069 = vmatpush.xpose.msra.mxu0 0.0
    %1070 = vmatpush.xpose.msra.mxu0 0.0
    %1071 = vmatpush.xpose.msra.mxu0 0.0
    %1072 = vmatpush.xpose.msra.mxu0 %v1055
    %1073 = vmatmul.f32.gmra.mxu0 %v1053
    %v1074 = vpop.f32.mrf.mxu0
    %v1075 = vadd.f32 0.0, %v1074
    %1076 = vdwg.mxu0
    %v1077 = vmul.f32 %v907, 0.35355338
    %v1078 = vmul.f32 %v931, 0.35355338
    %v1079 = vmul.f32 %v955, 0.35355338
    %v1080 = vmul.f32 %v979, 0.35355338
    %v1081 = vmul.f32 %v1003, 0.35355338
    %v1082 = vmul.f32 %v1027, 0.35355338
    %v1083 = vmul.f32 %v1051, 0.35355338
    %v1084 = vmul.f32 %v1075, 0.35355338
    %v1085 = vsel %vm183, %v1077, -inf
    %1086 = vmax.xlane.f32.xlu0 %v1085
    %v1087 = vpop.xlane.xlu0 %1086
    %v1088 = vsel %vm183, %v1078, -inf
    %1089 = vmax.xlane.f32.xlu0 %v1088
    %v1090 = vpop.xlane.xlu0 %1089
    %v1091 = vsel %vm183, %v1079, -inf
    %1092 = vmax.xlane.f32.xlu0 %v1091
    %v1093 = vpop.xlane.xlu0 %1092
    %v1094 = vsel %vm183, %v1080, -inf
    %1095 = vmax.xlane.f32.xlu0 %v1094
    %v1096 = vpop.xlane.xlu0 %1095
    %v1097 = vsel %vm183, %v1081, -inf
    %1098 = vmax.xlane.f32.xlu0 %v1097
    %v1099 = vpop.xlane.xlu0 %1098
    %v1100 = vsel %vm183, %v1082, -inf
    %1101 = vmax.xlane.f32.xlu0 %v1100
    %v1102 = vpop.xlane.xlu0 %1101
    %v1103 = vsel %vm183, %v1083, -inf
    %1104 = vmax.xlane.f32.xlu0 %v1103
    %v1105 = vpop.xlane.xlu0 %1104
    %v1106 = vsel %vm183, %v1084, -inf
    %1107 = vmax.xlane.f32.xlu0 %v1106
    %v1108 = vpop.xlane.xlu0 %1107
    %v1109 = vsub.f32 %v1077, %v1087
    %v1110 = vsub.f32 %v1078, %v1090
    %v1111 = vsub.f32 %v1079, %v1093
    %v1112 = vsub.f32 %v1080, %v1096
    %v1113 = vsub.f32 %v1081, %v1099
    %v1114 = vsub.f32 %v1082, %v1102
    %v1115 = vsub.f32 %v1083, %v1105
    %v1116 = vsub.f32 %v1084, %v1108
    %v1117 = vmul.f32 %v1109, 1.442695
    %v1118 = vpow.pop %v1117
    %v1119 = vmul.f32 %v1110, 1.442695
    %v1120 = vpow.pop %v1119
    %v1121 = vmul.f32 %v1111, 1.442695
    %v1122 = vpow.pop %v1121
    %v1123 = vmul.f32 %v1112, 1.442695
    %v1124 = vpow.pop %v1123
    %v1125 = vmul.f32 %v1113, 1.442695
    %v1126 = vpow.pop %v1125
    %v1127 = vmul.f32 %v1114, 1.442695
    %v1128 = vpow.pop %v1127
    %v1129 = vmul.f32 %v1115, 1.442695
    %v1130 = vpow.pop %v1129
    %v1131 = vmul.f32 %v1116, 1.442695
    %v1132 = vpow.pop %v1131
    %v1133 = vsel %vm183, %v1118, 0.0
    %1134 = vadd.xlane.f32.xlu0 %v1133
    %v1135 = vpop.xlane.xlu0 %1134
    %v1136 = vsel %vm183, %v1120, 0.0
    %1137 = vadd.xlane.f32.xlu0 %v1136
    %v1138 = vpop.xlane.xlu0 %1137
    %v1139 = vsel %vm183, %v1122, 0.0
    %1140 = vadd.xlane.f32.xlu0 %v1139
    %v1141 = vpop.xlane.xlu0 %1140
    %v1142 = vsel %vm183, %v1124, 0.0
    %1143 = vadd.xlane.f32.xlu0 %v1142
    %v1144 = vpop.xlane.xlu0 %1143
    %v1145 = vsel %vm183, %v1126, 0.0
    %1146 = vadd.xlane.f32.xlu0 %v1145
    %v1147 = vpop.xlane.xlu0 %1146
    %v1148 = vsel %vm183, %v1128, 0.0
    %1149 = vadd.xlane.f32.xlu0 %v1148
    %v1150 = vpop.xlane.xlu0 %1149
    %v1151 = vsel %vm183, %v1130, 0.0
    %1152 = vadd.xlane.f32.xlu0 %v1151
    %v1153 = vpop.xlane.xlu0 %1152
    %v1154 = vsel %vm183, %v1132, 0.0
    %1155 = vadd.xlane.f32.xlu0 %v1154
    %v1156 = vpop.xlane.xlu0 %1155
    %v1157 = vrcp.pop %v1135
    %v1158 = vmul.f32 %v1135, %v1157
    %v1159 = vsub.f32 1.0, %v1158
    %v1160 = vmul.f32 %v1157, %v1159
    %v1161 = vadd.f32 %v1157, %v1160
    %vm1162 = vweird.f32 %v1135
    %vm1163 = vweird.f32 %v1157
    %vm1164 = vmor %vm1162, %vm1163
    %v1165 = vsel %vm1164, %v1157, %v1161
    %v1166 = vand.u32 2147483647, %v1135
    %vm1167 = vcmp.eq.f32.partialorder %v1166, 8.507059e+37
    %v1168 = vand.u32 %v1135, 2147483648
    %v1169 = vor.u32 1.1754944e-38, %v1168
    %v1170 = vsel %vm1167, %v1169, %v1165
    %v1171 = vmul.f32 %v1118, %v1170
    %v1172 = vrcp.pop %v1138
    %v1173 = vmul.f32 %v1138, %v1172
    %v1174 = vsub.f32 1.0, %v1173
    %v1175 = vmul.f32 %v1172, %v1174
    %v1176 = vadd.f32 %v1172, %v1175
    %vm1177 = vweird.f32 %v1138
    %vm1178 = vweird.f32 %v1172
    %vm1179 = vmor %vm1177, %vm1178
    %v1180 = vsel %vm1179, %v1172, %v1176
    %v1181 = vand.u32 2147483647, %v1138
    %vm1182 = vcmp.eq.f32.partialorder %v1181, 8.507059e+37
    %v1183 = vand.u32 %v1138, 2147483648
    %v1184 = vor.u32 1.1754944e-38, %v1183
    %v1185 = vsel %vm1182, %v1184, %v1180
    %v1186 = vmul.f32 %v1120, %v1185
    %v1187 = vrcp.pop %v1141
    %v1188 = vmul.f32 %v1141, %v1187
    %v1189 = vsub.f32 1.0, %v1188
    %v1190 = vmul.f32 %v1187, %v1189
    %v1191 = vadd.f32 %v1187, %v1190
    %vm1192 = vweird.f32 %v1141
    %vm1193 = vweird.f32 %v1187
    %vm1194 = vmor %vm1192, %vm1193
    %v1195 = vsel %vm1194, %v1187, %v1191
    %v1196 = vand.u32 2147483647, %v1141
    %vm1197 = vcmp.eq.f32.partialorder %v1196, 8.507059e+37
    %v1198 = vand.u32 %v1141, 2147483648
    %v1199 = vor.u32 1.1754944e-38, %v1198
    %v1200 = vsel %vm1197, %v1199, %v1195
    %v1201 = vmul.f32 %v1122, %v1200
    %v1202 = vrcp.pop %v1144
    %v1203 = vmul.f32 %v1144, %v1202
    %v1204 = vsub.f32 1.0, %v1203
    %v1205 = vmul.f32 %v1202, %v1204
    %v1206 = vadd.f32 %v1202, %v1205
    %vm1207 = vweird.f32 %v1144
    %vm1208 = vweird.f32 %v1202
    %vm1209 = vmor %vm1207, %vm1208
    %v1210 = vsel %vm1209, %v1202, %v1206
    %v1211 = vand.u32 2147483647, %v1144
    %vm1212 = vcmp.eq.f32.partialorder %v1211, 8.507059e+37
    %v1213 = vand.u32 %v1144, 2147483648
    %v1214 = vor.u32 1.1754944e-38, %v1213
    %v1215 = vsel %vm1212, %v1214, %v1210
    %v1216 = vmul.f32 %v1124, %v1215
    %v1217 = vrcp.pop %v1147
    %v1218 = vmul.f32 %v1147, %v1217
    %v1219 = vsub.f32 1.0, %v1218
    %v1220 = vmul.f32 %v1217, %v1219
    %v1221 = vadd.f32 %v1217, %v1220
    %vm1222 = vweird.f32 %v1147
    %vm1223 = vweird.f32 %v1217
    %vm1224 = vmor %vm1222, %vm1223
    %v1225 = vsel %vm1224, %v1217, %v1221
    %v1226 = vand.u32 2147483647, %v1147
    %vm1227 = vcmp.eq.f32.partialorder %v1226, 8.507059e+37
    %v1228 = vand.u32 %v1147, 2147483648
    %v1229 = vor.u32 1.1754944e-38, %v1228
    %v1230 = vsel %vm1227, %v1229, %v1225
    %v1231 = vmul.f32 %v1126, %v1230
    %v1232 = vrcp.pop %v1150
    %v1233 = vmul.f32 %v1150, %v1232
    %v1234 = vsub.f32 1.0, %v1233
    %v1235 = vmul.f32 %v1232, %v1234
    %v1236 = vadd.f32 %v1232, %v1235
    %vm1237 = vweird.f32 %v1150
    %vm1238 = vweird.f32 %v1232
    %vm1239 = vmor %vm1237, %vm1238
    %v1240 = vsel %vm1239, %v1232, %v1236
    %v1241 = vand.u32 2147483647, %v1150
    %vm1242 = vcmp.eq.f32.partialorder %v1241, 8.507059e+37
    %v1243 = vand.u32 %v1150, 2147483648
    %v1244 = vor.u32 1.1754944e-38, %v1243
    %v1245 = vsel %vm1242, %v1244, %v1240
    %v1246 = vmul.f32 %v1128, %v1245
    %v1247 = vrcp.pop %v1153
    %v1248 = vmul.f32 %v1153, %v1247
    %v1249 = vsub.f32 1.0, %v1248
    %v1250 = vmul.f32 %v1247, %v1249
    %v1251 = vadd.f32 %v1247, %v1250
    %vm1252 = vweird.f32 %v1153
    %vm1253 = vweird.f32 %v1247
    %vm1254 = vmor %vm1252, %vm1253
    %v1255 = vsel %vm1254, %v1247, %v1251
    %v1256 = vand.u32 2147483647, %v1153
    %vm1257 = vcmp.eq.f32.partialorder %v1256, 8.507059e+37
    %v1258 = vand.u32 %v1153, 2147483648
    %v1259 = vor.u32 1.1754944e-38, %v1258
    %v1260 = vsel %vm1257, %v1259, %v1255
    %v1261 = vmul.f32 %v1130, %v1260
    %v1262 = vrcp.pop %v1156
    %v1263 = vmul.f32 %v1156, %v1262
    %v1264 = vsub.f32 1.0, %v1263
    %v1265 = vmul.f32 %v1262, %v1264
    %v1266 = vadd.f32 %v1262, %v1265
    %vm1267 = vweird.f32 %v1156
    %vm1268 = vweird.f32 %v1262
    %vm1269 = vmor %vm1267, %vm1268
    %v1270 = vsel %vm1269, %v1262, %v1266
    %v1271 = vand.u32 2147483647, %v1156
    %vm1272 = vcmp.eq.f32.partialorder %v1271, 8.507059e+37
    %v1273 = vand.u32 %v1156, 2147483648
    %v1274 = vor.u32 1.1754944e-38, %v1273
    %v1275 = vsel %vm1272, %v1274, %v1270
    %v1276 = vmul.f32 %v1132, %v1275
    %1277 = vrot.lane.b32.xlu0 %v165, 96
    %v1278 = vpop.permute.xlu0 %1277
    %v1281 = vsel %vm183, %v1171, 0
    %1283 = vmatpush.msra.mxu0 0.0
    %1284 = vmatpush.msra.mxu0 0.0
    %1285 = vmatpush.msra.mxu0 0.0
    %1286 = vmatpush.msra.mxu0 0.0
    %1287 = vmatpush.msra.mxu0 0.0
    %1288 = vmatpush.msra.mxu0 0.0
    %1289 = vmatpush.msra.mxu0 0.0
    %1290 = vmatpush.msra.mxu0 0.0
    %1291 = vmatpush.msra.mxu0 0.0
    %1292 = vmatpush.msra.mxu0 0.0
    %1293 = vmatpush.msra.mxu0 0.0
    %1294 = vmatpush.msra.mxu0 0.0
    %1295 = vmatpush.msra.mxu0 0.0
    %1296 = vmatpush.msra.mxu0 0.0
    %1297 = vmatpush.msra.mxu0 0.0
    %1298 = vmatpush.msra.mxu0 %v1278
    %1299 = vmatmul.f32.gmra.mxu0 %v1281
    %v1300 = vpop.f32.mrf.mxu0
    %v1301 = vadd.f32 0.0, %v1300
    %1302 = vdwg.mxu0
    %1303 = vrot.lane.b32.xlu0 %v874, 96
    %v1304 = vpop.permute.xlu0 %1303
    %v1307 = vsel %vm183, %v1186, 0
    %1309 = vmatpush.msra.mxu0 0.0
    %1310 = vmatpush.msra.mxu0 0.0
    %1311 = vmatpush.msra.mxu0 0.0
    %1312 = vmatpush.msra.mxu0 0.0
    %1313 = vmatpush.msra.mxu0 0.0
    %1314 = vmatpush.msra.mxu0 0.0
    %1315 = vmatpush.msra.mxu0 0.0
    %1316 = vmatpush.msra.mxu0 0.0
    %1317 = vmatpush.msra.mxu0 0.0
    %1318 = vmatpush.msra.mxu0 0.0
    %1319 = vmatpush.msra.mxu0 0.0
    %1320 = vmatpush.msra.mxu0 0.0
    %1321 = vmatpush.msra.mxu0 0.0
    %1322 = vmatpush.msra.mxu0 0.0
    %1323 = vmatpush.msra.mxu0 0.0
    %1324 = vmatpush.msra.mxu0 %v1304
    %1325 = vmatmul.f32.gmra.mxu0 %v1307
    %v1326 = vpop.f32.mrf.mxu0
    %v1327 = vadd.f32 0.0, %v1326
    %1328 = vdwg.mxu0
    %1329 = vrot.lane.b32.xlu0 %v878, 96
    %v1330 = vpop.permute.xlu0 %1329
    %v1333 = vsel %vm183, %v1201, 0
    %1335 = vmatpush.msra.mxu0 0.0
    %1336 = vmatpush.msra.mxu0 0.0
    %1337 = vmatpush.msra.mxu0 0.0
    %1338 = vmatpush.msra.mxu0 0.0
    %1339 = vmatpush.msra.mxu0 0.0
    %1340 = vmatpush.msra.mxu0 0.0
    %1341 = vmatpush.msra.mxu0 0.0
    %1342 = vmatpush.msra.mxu0 0.0
    %1343 = vmatpush.msra.mxu0 0.0
    %1344 = vmatpush.msra.mxu0 0.0
    %1345 = vmatpush.msra.mxu0 0.0
    %1346 = vmatpush.msra.mxu0 0.0
    %1347 = vmatpush.msra.mxu0 0.0
    %1348 = vmatpush.msra.mxu0 0.0
    %1349 = vmatpush.msra.mxu0 0.0
    %1350 = vmatpush.msra.mxu0 %v1330
    %1351 = vmatmul.f32.gmra.mxu0 %v1333
    %v1352 = vpop.f32.mrf.mxu0
    %v1353 = vadd.f32 0.0, %v1352
    %1354 = vdwg.mxu0
    %1355 = vrot.lane.b32.xlu0 %v882, 96
    %v1356 = vpop.permute.xlu0 %1355
    %v1359 = vsel %vm183, %v1216, 0
    %1361 = vmatpush.msra.mxu0 0.0
    %1362 = vmatpush.msra.mxu0 0.0
    %1363 = vmatpush.msra.mxu0 0.0
    %1364 = vmatpush.msra.mxu0 0.0
    %1365 = vmatpush.msra.mxu0 0.0
    %1366 = vmatpush.msra.mxu0 0.0
    %1367 = vmatpush.msra.mxu0 0.0
    %1368 = vmatpush.msra.mxu0 0.0
    %1369 = vmatpush.msra.mxu0 0.0
    %1370 = vmatpush.msra.mxu0 0.0
    %1371 = vmatpush.msra.mxu0 0.0
    %1372 = vmatpush.msra.mxu0 0.0
    %1373 = vmatpush.msra.mxu0 0.0
    %1374 = vmatpush.msra.mxu0 0.0
    %1375 = vmatpush.msra.mxu0 0.0
    %1376 = vmatpush.msra.mxu0 %v1356
    %1377 = vmatmul.f32.gmra.mxu0 %v1359
    %v1378 = vpop.f32.mrf.mxu0
    %v1379 = vadd.f32 0.0, %v1378
    %1380 = vdwg.mxu0
    %1381 = vrot.lane.b32.xlu0 %v166, 96
    %v1382 = vpop.permute.xlu0 %1381
    %v1385 = vsel %vm183, %v1231, 0
    %1387 = vmatpush.msra.mxu0 0.0
    %1388 = vmatpush.msra.mxu0 0.0
    %1389 = vmatpush.msra.mxu0 0.0
    %1390 = vmatpush.msra.mxu0 0.0
    %1391 = vmatpush.msra.mxu0 0.0
    %1392 = vmatpush.msra.mxu0 0.0
    %1393 = vmatpush.msra.mxu0 0.0
    %1394 = vmatpush.msra.mxu0 0.0
    %1395 = vmatpush.msra.mxu0 0.0
    %1396 = vmatpush.msra.mxu0 0.0
    %1397 = vmatpush.msra.mxu0 0.0
    %1398 = vmatpush.msra.mxu0 0.0
    %1399 = vmatpush.msra.mxu0 0.0
    %1400 = vmatpush.msra.mxu0 0.0
    %1401 = vmatpush.msra.mxu0 0.0
    %1402 = vmatpush.msra.mxu0 %v1382
    %1403 = vmatmul.f32.gmra.mxu0 %v1385
    %v1404 = vpop.f32.mrf.mxu0
    %v1405 = vadd.f32 0.0, %v1404
    %1406 = vdwg.mxu0
    %1407 = vrot.lane.b32.xlu0 %v876, 96
    %v1408 = vpop.permute.xlu0 %1407
    %v1411 = vsel %vm183, %v1246, 0
    %1413 = vmatpush.msra.mxu0 0.0
    %1414 = vmatpush.msra.mxu0 0.0
    %1415 = vmatpush.msra.mxu0 0.0
    %1416 = vmatpush.msra.mxu0 0.0
    %1417 = vmatpush.msra.mxu0 0.0
    %1418 = vmatpush.msra.mxu0 0.0
    %1419 = vmatpush.msra.mxu0 0.0
    %1420 = vmatpush.msra.mxu0 0.0
    %1421 = vmatpush.msra.mxu0 0.0
    %1422 = vmatpush.msra.mxu0 0.0
    %1423 = vmatpush.msra.mxu0 0.0
    %1424 = vmatpush.msra.mxu0 0.0
    %1425 = vmatpush.msra.mxu0 0.0
    %1426 = vmatpush.msra.mxu0 0.0
    %1427 = vmatpush.msra.mxu0 0.0
    %1428 = vmatpush.msra.mxu0 %v1408
    %1429 = vmatmul.f32.gmra.mxu0 %v1411
    %v1430 = vpop.f32.mrf.mxu0
    %v1431 = vadd.f32 0.0, %v1430
    %1432 = vdwg.mxu0
    %1433 = vrot.lane.b32.xlu0 %v880, 96
    %v1434 = vpop.permute.xlu0 %1433
    %v1437 = vsel %vm183, %v1261, 0
    %1439 = vmatpush.msra.mxu0 0.0
    %1440 = vmatpush.msra.mxu0 0.0
    %1441 = vmatpush.msra.mxu0 0.0
    %1442 = vmatpush.msra.mxu0 0.0
    %1443 = vmatpush.msra.mxu0 0.0
    %1444 = vmatpush.msra.mxu0 0.0
    %1445 = vmatpush.msra.mxu0 0.0
    %1446 = vmatpush.msra.mxu0 0.0
    %1447 = vmatpush.msra.mxu0 0.0
    %1448 = vmatpush.msra.mxu0 0.0
    %1449 = vmatpush.msra.mxu0 0.0
    %1450 = vmatpush.msra.mxu0 0.0
    %1451 = vmatpush.msra.mxu0 0.0
    %1452 = vmatpush.msra.mxu0 0.0
    %1453 = vmatpush.msra.mxu0 0.0
    %1454 = vmatpush.msra.mxu0 %v1434
    %1455 = vmatmul.f32.gmra.mxu0 %v1437
    %v1456 = vpop.f32.mrf.mxu0
    %v1457 = vadd.f32 0.0, %v1456
    %1458 = vdwg.mxu0
    %1459 = vrot.lane.b32.xlu0 %v884, 96
    %v1460 = vpop.permute.xlu0 %1459
    %v1463 = vsel %vm183, %v1276, 0
    %1465 = vmatpush.msra.mxu0 0.0
    %1466 = vmatpush.msra.mxu0 0.0
    %1467 = vmatpush.msra.mxu0 0.0
    %1468 = vmatpush.msra.mxu0 0.0
    %1469 = vmatpush.msra.mxu0 0.0
    %1470 = vmatpush.msra.mxu0 0.0
    %1471 = vmatpush.msra.mxu0 0.0
    %1472 = vmatpush.msra.mxu0 0.0
    %1473 = vmatpush.msra.mxu0 0.0
    %1474 = vmatpush.msra.mxu0 0.0
    %1475 = vmatpush.msra.mxu0 0.0
    %1476 = vmatpush.msra.mxu0 0.0
    %1477 = vmatpush.msra.mxu0 0.0
    %1478 = vmatpush.msra.mxu0 0.0
    %1479 = vmatpush.msra.mxu0 0.0
    %1480 = vmatpush.msra.mxu0 %v1460
    %1481 = vmatmul.f32.gmra.mxu0 %v1463
    %v1482 = vpop.f32.mrf.mxu0
    %v1483 = vadd.f32 0.0, %v1482
    %1484 = vdwg.mxu0
    %1487 = vrot.lane.b32.xlu0 %v1327, 8
    %v1488 = vpop.permute.xlu0 %1487
    %1489 = vrot.lane.b32.xlu0 %v1431, 8
    %v1490 = vpop.permute.xlu0 %1489
    %1495 = vrot.lane.b32.xlu0 %v1353, 16
    %v1496 = vpop.permute.xlu0 %1495
    %1497 = vrot.lane.b32.xlu0 %v1457, 16
    %v1498 = vpop.permute.xlu0 %1497
    %1503 = vrot.lane.b32.xlu0 %v1379, 24
    %v1504 = vpop.permute.xlu0 %1503
    %1505 = vrot.lane.b32.xlu0 %v1483, 24
    %v1506 = vpop.permute.xlu0 %1505
    %v1509 = vsel %vm183, %v1301, %v1488
    %v1510 = vsel %vm183, %v1405, %v1490
    %v1511 = vsel %vm720, %v1509, %v1496
    %v1512 = vsel %vm720, %v1510, %v1498
    %v1513 = vsel %vm723, %v1511, %v1504
    %v1514 = vsel %vm723, %v1512, %v1506
    %v1515 = vld [vmem:[#allocation6 + $0x20] sm:$0xff]
    %v1516 = vld [vmem:[#allocation6 + $0x58] sm:$0xff]
    %v1517 = vld [vmem:[#allocation6 + $0x90] sm:$0xff]
    %v1518 = vld [vmem:[#allocation6 + $0xc8] sm:$0xff]
    %v1519 = vld [vmem:[#allocation7 + $0x4] sm:$0x1]
    %v1520 = vperm.slane %v1519, 0
    %v1522 = vsel %vm92, %v1513, 0
    %v1525 = vsel %vm92, %v1514, 0
    %1527 = vmatpush.msra.mxu0 0.0
    %1528 = vmatpush.msra.mxu0 0.0
    %1529 = vmatpush.msra.mxu0 0.0
    %1530 = vmatpush.msra.mxu0 0.0
    %1531 = vmatpush.msra.mxu0 0.0
    %1532 = vmatpush.msra.mxu0 0.0
    %1533 = vmatpush.msra.mxu0 0.0
    %1534 = vmatpush.msra.mxu0 0.0
    %1535 = vmatpush.msra.mxu0 0.0
    %1536 = vmatpush.msra.mxu0 0.0
    %1537 = vmatpush.msra.mxu0 0.0
    %1538 = vmatpush.msra.mxu0 0.0
    %1539 = vmatpush.msra.mxu0 %v1518
    %1540 = vmatpush.msra.mxu0 %v1517
    %1541 = vmatpush.msra.mxu0 %v1516
    %1542 = vmatpush.msra.mxu0 %v1515
    %1543 = vmatmul.f32.gmra.mxu0 %v1522
    %v1544 = vpop.f32.mrf.mxu0
    %v1545 = vadd.f32 %v1520, %v1544
    %1546 = vmatmul.f32.gmra.mxu0 %v1525
    %v1547 = vpop.f32.mrf.mxu0
    %v1548 = vadd.f32 %v1520, %v1547
    %1549 = vdwg.mxu0
    %v1550 = vsel %vm183, %v1171, 0.0
    %v1551 = vsel %vm183, %v1186, 0.0
    %v1552 = vadd.f32 %v1550, %v1551
    %v1553 = vsel %vm183, %v1201, 0.0
    %v1554 = vadd.f32 %v1552, %v1553
    %v1555 = vsel %vm183, %v1216, 0.0
    %v1556 = vadd.f32 %v1554, %v1555
    %v1557 = vsel %vm183, %v1231, 0.0
    %v1558 = vsel %vm183, %v1246, 0.0
    %v1559 = vadd.f32 %v1557, %v1558
    %v1560 = vsel %vm183, %v1261, 0.0
    %v1561 = vadd.f32 %v1559, %v1560
    %v1562 = vsel %vm183, %v1276, 0.0
    %v1563 = vadd.f32 %v1561, %v1562
    %v1564 = vrcp.pop 4.0
    %v1565 = vmul.f32 4.0, %v1564
    %v1566 = vsub.f32 1.0, %v1565
    %v1567 = vmul.f32 %v1564, %v1566
    %v1568 = vadd.f32 %v1564, %v1567
    %vm1569 = vweird.f32 %v1564
    %v1570 = vsel %vm1569, %v1564, %v1568
    %v1571 = vmul.f32 %v1556, %v1570
    %v1572 = vmul.f32 %v1563, %v1570
    %v1573 = vadd.f32 %v820, %v1545
    %v1574 = vadd.f32 %v821, %v1548
    %v1575 = vld [vmem:[#allocation7 + $0x9] sm:$0x1]
    %v1576 = vld [vmem:[#allocation7 + $0xa] sm:$0x1]
    %v1577 = vsel %vm92, %v1573, 0.0
    %1578 = vadd.xlane.f32.xlu0 %v1577
    %v1579 = vpop.xlane.xlu0 %1578
    %v1580 = vsel %vm92, %v1574, 0.0
    %1581 = vadd.xlane.f32.xlu0 %v1580
    %v1582 = vpop.xlane.xlu0 %1581
    %v1583 = vmul.f32 %v1579, %v777
    %v1584 = vmul.f32 %v1582, %v777
    %v1585 = vsub.f32 %v1573, %v1583
    %v1586 = vsub.f32 %v1574, %v1584
    %v1587 = vmul.f32 %v1585, %v1585
    %v1588 = vmul.f32 %v1586, %v1586
    %v1589 = vsel %vm92, %v1587, 0.0
    %1590 = vadd.xlane.f32.xlu0 %v1589
    %v1591 = vpop.xlane.xlu0 %1590
    %v1592 = vsel %vm92, %v1588, 0.0
    %1593 = vadd.xlane.f32.xlu0 %v1592
    %v1594 = vpop.xlane.xlu0 %1593
    %v1595 = vmul.f32 %v1591, %v777
    %v1596 = vmul.f32 %v1594, %v777
    %v1597 = vadd.f32 %v1595, 1e-05
    %v1598 = vadd.f32 %v1596, 1e-05
    %v1599 = vrsqrt.pop %v1597
    %v1600 = vmul.f32 %v1599, %v1597
    %v1601 = vmul.f32 %v1600, %v1599
    %v1602 = vmul.f32 0.5, %v1601
    %v1603 = vsub.f32 1.5, %v1602
    %v1604 = vmul.f32 %v1599, %v1603
    %vm1605 = vweird.f32 %v1597
    %vm1606 = vweird.f32 %v1599
    %vm1607 = vmor %vm1605, %vm1606
    %v1608 = vsel %vm1607, %v1599, %v1604
    %v1609 = vrsqrt.pop %v1598
    %v1610 = vmul.f32 %v1609, %v1598
    %v1611 = vmul.f32 %v1610, %v1609
    %v1612 = vmul.f32 0.5, %v1611
    %v1613 = vsub.f32 1.5, %v1612
    %v1614 = vmul.f32 %v1609, %v1613
    %vm1615 = vweird.f32 %v1598
    %vm1616 = vweird.f32 %v1609
    %vm1617 = vmor %vm1615, %vm1616
    %v1618 = vsel %vm1617, %v1609, %v1614
    %v1619 = vmul.f32 %v1585, %v1608
    %v1620 = vmul.f32 %v1586, %v1618
    %v1621 = vperm.slane %v1575, 0
    %v1622 = vmul.f32 %v1619, %v1621
    %v1623 = vmul.f32 %v1620, %v1621
    %v1624 = vperm.slane %v1576, 0
    %v1625 = vadd.f32 %v1622, %v1624
    %v1626 = vadd.f32 %v1623, %v1624
    %v1627 = vld [vmem:[#allocation6 + $0x28] sm:$0xff]
    %v1628 = vld [vmem:[#allocation6 + $0x60] sm:$0xff]
    %v1629 = vld [vmem:[#allocation6 + $0x98] sm:$0xff]
    %v1630 = vld [vmem:[#allocation6 + $0xd0] sm:$0xff]
    %v1631 = vld [vmem:[#allocation7 + $0x5] sm:$0x1]
    %v1632 = vperm.slane %v1631, 0
    %v1634 = vsel %vm92, %v1625, 0
    %v1637 = vsel %vm92, %v1626, 0
    %1639 = vmatpush.msra.mxu0 0.0
    %1640 = vmatpush.msra.mxu0 0.0
    %1641 = vmatpush.msra.mxu0 0.0
    %1642 = vmatpush.msra.mxu0 0.0
    %1643 = vmatpush.msra.mxu0 0.0
    %1644 = vmatpush.msra.mxu0 0.0
    %1645 = vmatpush.msra.mxu0 0.0
    %1646 = vmatpush.msra.mxu0 0.0
    %1647 = vmatpush.msra.mxu0 0.0
    %1648 = vmatpush.msra.mxu0 0.0
    %1649 = vmatpush.msra.mxu0 0.0
    %1650 = vmatpush.msra.mxu0 0.0
    %1651 = vmatpush.msra.mxu0 %v1630
    %1652 = vmatpush.msra.mxu0 %v1629
    %1653 = vmatpush.msra.mxu0 %v1628
    %1654 = vmatpush.msra.mxu0 %v1627
    %1655 = vmatmul.f32.gmra.mxu0 %v1634
    %v1656 = vpop.f32.mrf.mxu0
    %v1657 = vadd.f32 %v1632, %v1656
    %1658 = vmatmul.f32.gmra.mxu0 %v1637
    %v1659 = vpop.f32.mrf.mxu0
    %v1660 = vadd.f32 %v1632, %v1659
    %1661 = vdwg.mxu0
    %v1662 = vmax.f32 %v1657, 0.0
    %v1663 = vmax.f32 %v1660, 0.0
    %v1664 = vld [vmem:[#allocation6 + $0x30] sm:$0xff]
    %v1665 = vld [vmem:[#allocation6 + $0x68] sm:$0xff]
    %v1666 = vld [vmem:[#allocation6 + $0xa0] sm:$0xff]
    %v1667 = vld [vmem:[#allocation6 + $0xd8] sm:$0xff]
    %v1668 = vld [vmem:[#allocation6 + $0x110] sm:$0xff]
    %v1669 = vld [vmem:[#allocation6 + $0x148] sm:$0xff]
    %v1670 = vld [vmem:[#allocation6 + $0x180] sm:$0xff]
    %v1671 = vld [vmem:[#allocation6 + $0x1b8] sm:$0xff]
    %v1672 = vld [vmem:[#allocation7 + $0x6] sm:$0x1]
    %v1673 = vperm.slane %v1672, 0
    %vm1674 = vcmask 523264
    %v1676 = vsel %vm1674, %v1662, 0
    %v1679 = vsel %vm1674, %v1663, 0
    %1681 = vmatpush.msra.mxu0 0.0
    %1682 = vmatpush.msra.mxu0 0.0
    %1683 = vmatpush.msra.mxu0 0.0
    %1684 = vmatpush.msra.mxu0 0.0
    %1685 = vmatpush.msra.mxu0 0.0
    %1686 = vmatpush.msra.mxu0 0.0
    %1687 = vmatpush.msra.mxu0 0.0
    %1688 = vmatpush.msra.mxu0 0.0
    %1689 = vmatpush.msra.mxu0 %v1671
    %1690 = vmatpush.msra.mxu0 %v1670
    %1691 = vmatpush.msra.mxu0 %v1669
    %1692 = vmatpush.msra.mxu0 %v1668
    %1693 = vmatpush.msra.mxu0 %v1667
    %1694 = vmatpush.msra.mxu0 %v1666
    %1695 = vmatpush.msra.mxu0 %v1665
    %1696 = vmatpush.msra.mxu0 %v1664
    %1697 = vmatmul.f32.gmra.mxu0 %v1676
    %v1698 = vpop.f32.mrf.mxu0
    %v1699 = vadd.f32 %v1673, %v1698
    %1700 = vmatmul.f32.gmra.mxu0 %v1679
    %v1701 = vpop.f32.mrf.mxu0
    %v1702 = vadd.f32 %v1673, %v1701
    %1703 = vdwg.mxu0
    %v1704 = vadd.f32 %v1625, %v1699
    %v1705 = vadd.f32 %v1626, %v1702
    %v1706 = vld [vmem:[#allocation7 + $0xb] sm:$0x1]
    %v1707 = vld [vmem:[#allocation7 + $0xc] sm:$0x1]
    %v1708 = vsel %vm92, %v1704, 0.0
    %1709 = vadd.xlane.f32.xlu0 %v1708
    %v1710 = vpop.xlane.xlu0 %1709
    %v1711 = vsel %vm92, %v1705, 0.0
    %1712 = vadd.xlane.f32.xlu0 %v1711
    %v1713 = vpop.xlane.xlu0 %1712
    %v1714 = vmul.f32 %v1710, %v777
    %v1715 = vmul.f32 %v1713, %v777
    %v1716 = vsub.f32 %v1704, %v1714
    %v1717 = vsub.f32 %v1705, %v1715
    %v1718 = vmul.f32 %v1716, %v1716
    %v1719 = vmul.f32 %v1717, %v1717
    %v1720 = vsel %vm92, %v1718, 0.0
    %1721 = vadd.xlane.f32.xlu0 %v1720
    %v1722 = vpop.xlane.xlu0 %1721
    %v1723 = vsel %vm92, %v1719, 0.0
    %1724 = vadd.xlane.f32.xlu0 %v1723
    %v1725 = vpop.xlane.xlu0 %1724
    %v1726 = vmul.f32 %v1722, %v777
    %v1727 = vmul.f32 %v1725, %v777
    %v1728 = vadd.f32 %v1726, 1e-05
    %v1729 = vadd.f32 %v1727, 1e-05
    %v1730 = vrsqrt.pop %v1728
    %v1731 = vmul.f32 %v1730, %v1728
    %v1732 = vmul.f32 %v1731, %v1730
    %v1733 = vmul.f32 0.5, %v1732
    %v1734 = vsub.f32 1.5, %v1733
    %v1735 = vmul.f32 %v1730, %v1734
    %vm1736 = vweird.f32 %v1728
    %vm1737 = vweird.f32 %v1730
    %vm1738 = vmor %vm1736, %vm1737
    %v1739 = vsel %vm1738, %v1730, %v1735
    %v1740 = vrsqrt.pop %v1729
    %v1741 = vmul.f32 %v1740, %v1729
    %v1742 = vmul.f32 %v1741, %v1740
    %v1743 = vmul.f32 0.5, %v1742
    %v1744 = vsub.f32 1.5, %v1743
    %v1745 = vmul.f32 %v1740, %v1744
    %vm1746 = vweird.f32 %v1729
    %vm1747 = vweird.f32 %v1740
    %vm1748 = vmor %vm1746, %vm1747
    %v1749 = vsel %vm1748, %v1740, %v1745
    %v1750 = vmul.f32 %v1716, %v1739
    %v1751 = vmul.f32 %v1717, %v1749
    %v1752 = vperm.slane %v1706, 0
    %v1753 = vmul.f32 %v1750, %v1752
    %v1754 = vmul.f32 %v1751, %v1752
    %v1755 = vperm.slane %v1707, 0
    %v1756 = vadd.f32 %v1753, %v1755
    %v1757 = vadd.f32 %v1754, %v1755
    %1758 = vst.msk [vmem:[%s4] sm:$0xff] %vm92, %v1756
    %1759 = vst.msk [vmem:[%s4 + $0x8] sm:$0xff] %vm92, %v1757
    %1762 = vrot.lane.b32.xlu0 %v1571, 32
    %v1763 = vpop.permute.xlu0 %1762
    %1764 = vrot.lane.b32.xlu0 %v1572, 32
    %v1765 = vpop.permute.xlu0 %1764
    %vm1768 = vcmask 326912
    %1769 = vst.msk [vmem:[%s4] sm:$0xff] %vm1768, %v1763
    %1770 = vst.msk [vmem:[%s4 + $0x8] sm:$0xff] %vm1768, %v1765
    // Predicated region
    $region34: #{transformer_decoder_layer.1} parent=1 // pred_check
      _
    $region35: #{transformer_decoder_layer.1} parent=1 // pred_check_branch
      %1772 = sbr.rel (0) target = $region37
    $region36: #{transformer_decoder_layer.1} parent=1 // pred_region
      _
    $region37: #{transformer_decoder_layer.1} parent=1 // pred_fallthru
      _
    // Predicated region
    $region38: #{transformer_decoder_layer.1} parent=1 // pred_check
      _
    $region39: #{transformer_decoder_layer.1} parent=1 // pred_check_branch
      %1774 = sbr.rel (0) target = $region41
    $region40: #{transformer_decoder_layer.1} parent=1 // pred_region
      _
    $region41: #{transformer_decoder_layer.1} parent=1 // pred_fallthru
      _
    %1775 = vsyncpa [#allocation3], 1
    %1776 = vsyncpa [#allocation5], 1
    %1777 = vsyncpa [#allocation8], 1

</llo_original>
